<compile_context>
chip_gen: v7x
topology: tpu7x:2x2x1
jax: 0.10.0
libtpu: 0.0.40
codegen_flags: <defaults>
</compile_context>

<pallas_src>
import functools

import jax
import jax.numpy as jnp
import numpy as np
from jax.experimental import pallas as pl
from jax.experimental.pallas import tpu as pltpu

_HI = jax.lax.Precision.HIGHEST


def _swish(x):
    return x * jax.nn.sigmoid(x)


# ----------------------------------------------------------------------------
# Fused MBConv kernel: one grid step == one batch element, everything in VMEM,
# all tensors (C, M) with channels on sublanes and flattened pixels on lanes.
# ----------------------------------------------------------------------------
def _make_mbconv_kernel(*, H, W, K, stride, plo, expand, use_residual):
    M = H * W

    def kernel(*refs):
        it = iter(refs)
        x_ref = next(it)                                   # (1, Cin, M)
        if expand:
            w_exp_ref = next(it)                           # (hidden, Cin)
            bn1_ref = next(it)                             # (hidden, 2)
        w_dw_ref = next(it)                                # (hidden, K*K)
        mask_ref = next(it)                                # (K*K, M) 0/1 tap validity
        bn2_ref = next(it)                                 # (hidden, 2)
        pool_ref = next(it)                                # (1, M)  1/Npool at pooled pixels
        w_se1_ref = next(it)                               # (hidden, Cr)
        b_se1_ref = next(it)                               # (1, Cr)
        w_se2t_ref = next(it)                              # (hidden, Cr)
        b_se2_ref = next(it)                               # (hidden, 1)
        w_projt_ref = next(it)                             # (Cout, hidden)
        bn3_ref = next(it)                                 # (Cout, 2)
        sel_ref = next(it) if stride != 1 else None        # (M, Mo) strided column select
        o_ref = next(it)                                   # (1, Cout, Mo)

        x_t = x_ref[0].astype(jnp.float32)                 # (Cin, M), lane-dense

        # ---- Stage 1: 1x1 expand conv + folded BN + Swish (MXU) -------------
        if expand:
            h = jnp.dot(w_exp_ref[...], x_t,
                        preferred_element_type=jnp.float32, precision=_HI)
            h = _swish(h * bn1_ref[:, 0:1] + bn1_ref[:, 1:2])   # (hidden, M)
        else:
            h = x_t

        # ---- Stage 2: depthwise KxK conv via lane rolls + boundary masks ----
        # tap(kh,kw)[m] = h[m + off] with off = (kh-plo)*W + (kw-plo); pixels
        # whose source falls outside the image (incl. row/batch wrap) are
        # zeroed by the precomputed mask.  Rolls use the XLU slot and co-issue
        # with the VPU FMAs; no padded scratch, no slice copies.
        acc = jnp.zeros_like(h)
        for kh in range(K):                                 # static, unrolled taps
            for kw in range(K):
                t = kh * K + kw
                off = (kh - plo) * W + (kw - plo)
                tap = h if off == 0 else pltpu.roll(h, shift=(-off) % M, axis=1)
                acc = acc + (tap * mask_ref[t:t + 1, :]) * w_dw_ref[:, t:t + 1]
        h = _swish(acc * bn2_ref[:, 0:1] + bn2_ref[:, 1:2])     # (hidden, M)

        # ---- Stage 3: squeeze-excitation (VPU/XLU only, no MXU) -------------
        pooled = jnp.sum(h * pool_ref[...], axis=1, keepdims=True)        # (C,1)
        s = _swish(jnp.sum(pooled * w_se1_ref[...], axis=0, keepdims=True)
                   + b_se1_ref[...])                                      # (1,Cr)
        s = jax.nn.sigmoid(jnp.sum(s * w_se2t_ref[...], axis=1, keepdims=True)
                           + b_se2_ref[...])                              # (C,1)
        h = h * s                                                         # per-channel scale

        # ---- Stage 4: 1x1 projection + folded BN (+ residual) ---------------
        y = jnp.dot(w_projt_ref[...], h,
                    preferred_element_type=jnp.float32, precision=_HI)    # (Cout, M)
        if stride != 1:
            # select the strided output pixels (stride-s conv == stride-1 conv
            # subsampled at (s*i, s*j)); tiny MXU matmul, residual is off here.
            y = jnp.dot(y, sel_ref[...],
                        preferred_element_type=jnp.float32, precision=_HI)  # (Cout, Mo)
        y = y * bn3_ref[:, 0:1] + bn3_ref[:, 1:2]
        if use_residual:
            y = y + x_t                                    # stride==1 and Cin==Cout
        o_ref[0] = y.astype(o_ref.dtype)                   # lane-dense (Cout, Mo) store

    return kernel


def _tap_masks(H, W, K, plo):
    """(K*K, H*W) 0/1 masks: tap (kh,kw) valid at pixel (i,j) iff source in-image."""
    ii, jj = np.meshgrid(np.arange(H), np.arange(W), indexing="ij")
    ii = ii.reshape(-1)
    jj = jj.reshape(-1)
    m = np.zeros((K * K, H * W), np.float32)
    for kh in range(K):
        for kw in range(K):
            dh, dw = kh - plo, kw - plo
            ok = (ii + dh >= 0) & (ii + dh < H) & (jj + dw >= 0) & (jj + dw < W)
            m[kh * K + kw] = ok.astype(np.float32)
    return m


# ----------------------------------------------------------------------------
# Full MBConvBlock forward (eval mode).  Input/output are NCHW (PyTorch).
# ----------------------------------------------------------------------------
def mbconv_forward(x_nchw, p, *, kernel_size, stride, use_residual, expand):
    N, Cin, H, W = x_nchw.shape
    hidden = p["w_dw"].shape[-1]
    Cout = p["w_proj"].shape[-1]
    Cr = p["w_se1"].shape[-1]
    K = kernel_size
    M = H * W

    # ZeroPad2d padding = max(k - s, 0), split [p//2, p - p//2] on both H and W
    pad = max(K - stride, 0)
    plo = pad // 2
    Ho = (H + pad - K) // stride + 1
    Wo = (W + pad - K) // stride + 1
    Mo = Ho * Wo

    if use_residual:
        assert stride == 1 and Cin == Cout, "residual requires stride==1 and Cin==Cout"

    # NCHW in, NCHW out: only free trailing-dim reshapes at the boundary.
    x2d = x_nchw.reshape(N, Cin, M).astype(jnp.float32)

    # Host-side constants (become compile-time constants under jit).
    dw_mask = _tap_masks(H, W, K, plo)
    if stride == 1:
        pool_mask = np.full((1, M), 1.0 / M, np.float32)
        sel = None
    else:
        pool_np = np.zeros((H, W), np.float32)
        sel = np.zeros((M, Mo), np.float32)
        for i in range(Ho):
            for j in range(Wo):
                pool_np[i * stride, j * stride] = 1.0 / Mo
                sel[(i * stride) * W + (j * stride), i * Wo + j] = 1.0
        pool_mask = pool_np.reshape(1, M)

    bn2 = jnp.stack([p["bn2_scale"], p["bn2_shift"]], axis=1)        # (hidden, 2)
    bn3 = jnp.stack([p["bn3_scale"], p["bn3_shift"]], axis=1)        # (Cout, 2)
    w_dw_t = jnp.transpose(p["w_dw"].reshape(K * K, hidden))         # (hidden, K*K)

    args = [x2d]
    in_specs = [pl.BlockSpec((1, Cin, M), lambda n: (n, 0, 0))]

    def add(a):  # replicated (whole-array, VMEM-resident) operand
        a = jnp.asarray(a, jnp.float32)
        args.append(a)
        in_specs.append(pl.BlockSpec(a.shape, lambda n, _nd=a.ndim: (0,) * _nd))

    if expand:
        add(p["w_exp"].T)                                            # (hidden, Cin)
        add(jnp.stack([p["bn1_scale"], p["bn1_shift"]], axis=1))     # (hidden, 2)
    add(w_dw_t)
    add(dw_mask)
    add(bn2)
    add(pool_mask)
    add(p["w_se1"])                                                  # (hidden, Cr)
    add(p["b_se1"].reshape(1, Cr))
    add(p["w_se2"].T)                                                # (hidden, Cr)
    add(p["b_se2"].reshape(hidden, 1))
    add(p["w_proj"].T)                                               # (Cout, hidden)
    add(bn3)
    if stride != 1:
        add(sel)

    kernel = _make_mbconv_kernel(H=H, W=W, K=K, stride=stride, plo=plo,
                                 expand=expand, use_residual=use_residual)

    out = pl.pallas_call(
        kernel,
        out_shape=jax.ShapeDtypeStruct((N, Cout, Mo), jnp.float32),
        grid=(N,),
        in_specs=in_specs,
        out_specs=pl.BlockSpec((1, Cout, Mo), lambda n: (n, 0, 0)),
        compiler_params=pltpu.CompilerParams(
            dimension_semantics=("parallel",),      # both TCs on v7x; no-op on v5e/v6e
            vmem_limit_bytes=32 * 1024 * 1024),
    )(*args)

    # TODO(synk): training-mode drop_connect (per-sample Bernoulli mask) not
    # implemented; eval-mode forward (identity) is reproduced here.
    return out.reshape(N, Cout, Ho, Wo)                              # NCHW


# ----------------------------------------------------------------------------
# Pure-JAX reference (for correctness check), precision pinned to HIGHEST.
# ----------------------------------------------------------------------------
def reference_forward(x_nchw, p, *, kernel_size, stride, use_residual, expand):
    x = jnp.transpose(x_nchw, (0, 2, 3, 1)).astype(jnp.float32)
    h = x
    if expand:
        h = _swish(jnp.einsum("nhwc,cd->nhwd", h, p["w_exp"], precision=_HI)
                   * p["bn1_scale"] + p["bn1_shift"])
    pad = max(kernel_size - stride, 0)
    plo, phi = pad // 2, pad - pad // 2
    hp = jnp.pad(h, ((0, 0), (plo, phi), (plo, phi), (0, 0)))
    N, Hp, Wp, C = hp.shape
    K = kernel_size
    Ho = (Hp - K) // stride + 1
    Wo = (Wp - K) // stride + 1
    acc = jnp.zeros((N, Ho, Wo, C), jnp.float32)
    for kh in range(K):
        for kw in range(K):
            acc = acc + hp[:, kh:kh + stride * (Ho - 1) + 1:stride,
                           kw:kw + stride * (Wo - 1) + 1:stride, :] * p["w_dw"][kh, kw]
    h = _swish(acc * p["bn2_scale"] + p["bn2_shift"])
    pooled = jnp.mean(h, axis=(1, 2))
    s = _swish(jnp.dot(pooled, p["w_se1"], precision=_HI) + p["b_se1"])
    s = jax.nn.sigmoid(jnp.dot(s, p["w_se2"], precision=_HI) + p["b_se2"])
    h = h * s[:, None, None, :]
    out = (jnp.einsum("nhwc,cd->nhwd", h, p["w_proj"], precision=_HI)
           * p["bn3_scale"] + p["bn3_shift"])
    if use_residual:
        out = out + x
    return jnp.transpose(out, (0, 3, 1, 2))


# ----------------------------------------------------------------------------
# Deterministic parameter construction (shapes implied by the nn.Module)
# ----------------------------------------------------------------------------
def make_params(key, in_planes, out_planes, expand_ratio, kernel_size,
                reduction_ratio=4, eps=1e-5):
    hidden = in_planes * expand_ratio
    reduced = max(1, int(in_planes / reduction_ratio))
    ks = jax.random.split(key, 20)

    def nrm(k, shape, s=0.2):
        return s * jax.random.normal(k, shape, dtype=jnp.float32)

    def bn_fold(kg, kb, km, kv, c):
        gamma = 1.0 + nrm(kg, (c,), 0.1)
        beta = nrm(kb, (c,), 0.05)
        mean = nrm(km, (c,), 0.05)
        var = 1.0 + jnp.abs(nrm(kv, (c,), 0.1))
        scale = gamma / jnp.sqrt(var + eps)
        shift = beta - mean * scale
        return scale, shift

    p = {}
    p["w_exp"] = nrm(ks[0], (in_planes, hidden))                 # 1x1 expand
    p["bn1_scale"], p["bn1_shift"] = bn_fold(ks[1], ks[2], ks[3], ks[4], hidden)
    p["w_dw"] = nrm(ks[5], (kernel_size, kernel_size, hidden))   # depthwise
    p["bn2_scale"], p["bn2_shift"] = bn_fold(ks[6], ks[7], ks[8], ks[9], hidden)
    p["w_se1"] = nrm(ks[10], (hidden, reduced))                  # SE reduce (bias)
    p["b_se1"] = nrm(ks[11], (reduced,), 0.05)
    p["w_se2"] = nrm(ks[12], (reduced, hidden))                  # SE expand (bias)
    p["b_se2"] = nrm(ks[13], (hidden,), 0.05)
    p["w_proj"] = nrm(ks[14], (hidden, out_planes))              # 1x1 project
    p["bn3_scale"], p["bn3_shift"] = bn_fold(ks[15], ks[16], ks[17], ks[18], out_planes)
    return p, hidden


if __name__ == "__main__":
    # MBConvBlock(in_planes=8, out_planes=8, expand_ratio=4, kernel_size=3, stride=1)
    in_planes, out_planes, expand_ratio, kernel_size, stride = 8, 8, 4, 3, 1
    N, H, W = 2, 16, 16
    use_residual = (in_planes == out_planes) and (stride == 1)

    key = jax.random.PRNGKey(0)
    kx, kp = jax.random.split(key)
    x = jax.random.normal(kx, (N, in_planes, H, W), dtype=jnp.float32)  # NCHW input
    params, hidden = make_params(kp, in_planes, out_planes, expand_ratio, kernel_size)
    expand = (in_planes != hidden)

    fwd = jax.jit(functools.partial(mbconv_forward, kernel_size=kernel_size,
                                    stride=stride, use_residual=use_residual,
                                    expand=expand))
    out = jax.block_until_ready(fwd(x, params))

    ref = reference_forward(x, params, kernel_size=kernel_size, stride=stride,
                            use_residual=use_residual, expand=expand)
    ref = jax.block_until_ready(ref)

    assert out.shape == (N, out_planes, H, W)
    err = float(jnp.max(jnp.abs(out - ref)))
    # Both paths are f32 with matmul precision pinned to HIGHEST, so the bound
    # is tightened vs. the previous 1e-2; 5e-3 leaves margin for accumulation-
    # order differences between the MXU kernel and the XLA reference.
    assert err < 5e-3, err
    print("KERNEL_OK")
</pallas_src>

<mosaic_0001>
module attributes {stable_mosaic.version = 11 : i64} {
  func.func @kernel(%arg0: i32, %arg1: memref<1x8x256xf32, #tpu.memory_space<vmem>>, %arg2: memref<32x8xf32, #tpu.memory_space<vmem>>, %arg3: memref<32x2xf32, #tpu.memory_space<vmem>>, %arg4: memref<32x9xf32, #tpu.memory_space<vmem>>, %arg5: memref<9x256xf32, #tpu.memory_space<vmem>>, %arg6: memref<32x2xf32, #tpu.memory_space<vmem>>, %arg7: memref<1x256xf32, #tpu.memory_space<vmem>>, %arg8: memref<32x2xf32, #tpu.memory_space<vmem>>, %arg9: memref<1x2xf32, #tpu.memory_space<vmem>>, %arg10: memref<32x2xf32, #tpu.memory_space<vmem>>, %arg11: memref<32x1xf32, #tpu.memory_space<vmem>>, %arg12: memref<8x32xf32, #tpu.memory_space<vmem>>, %arg13: memref<8x2xf32, #tpu.memory_space<vmem>>, %arg14: memref<1x8x256xf32, #tpu.memory_space<vmem>>) attributes {dimension_semantics = [#tpu.dimension_semantics<parallel>], iteration_bounds = array<i64: 2>, scalar_prefetch = 0 : i64, scratch_operands = 0 : i64, tpu.core_type = #tpu.core_type<tc>, window_params = [{transform_indices = @transform_0, window_bounds = array<i64: 1, 8, 256>}, {pipeline_mode = #tpu.pipeline_mode<synchronous>, transform_indices = @transform_1, window_bounds = array<i64: 32, 8>}, {pipeline_mode = #tpu.pipeline_mode<synchronous>, transform_indices = @transform_2, window_bounds = array<i64: 32, 2>}, {pipeline_mode = #tpu.pipeline_mode<synchronous>, transform_indices = @transform_3, window_bounds = array<i64: 32, 9>}, {pipeline_mode = #tpu.pipeline_mode<synchronous>, transform_indices = @transform_4, window_bounds = array<i64: 9, 256>}, {pipeline_mode = #tpu.pipeline_mode<synchronous>, transform_indices = @transform_5, window_bounds = array<i64: 32, 2>}, {pipeline_mode = #tpu.pipeline_mode<synchronous>, transform_indices = @transform_6, window_bounds = array<i64: 1, 256>}, {pipeline_mode = #tpu.pipeline_mode<synchronous>, transform_indices = @transform_7, window_bounds = array<i64: 32, 2>}, {pipeline_mode = #tpu.pipeline_mode<synchronous>, transform_indices = @transform_8, window_bounds = array<i64: 1, 2>}, {pipeline_mode = #tpu.pipeline_mode<synchronous>, transform_indices = @transform_9, window_bounds = array<i64: 32, 2>}, {pipeline_mode = #tpu.pipeline_mode<synchronous>, transform_indices = @transform_10, window_bounds = array<i64: 32, 1>}, {pipeline_mode = #tpu.pipeline_mode<synchronous>, transform_indices = @transform_11, window_bounds = array<i64: 8, 32>}, {pipeline_mode = #tpu.pipeline_mode<synchronous>, transform_indices = @transform_12, window_bounds = array<i64: 8, 2>}, {transform_indices = @transform_13, window_bounds = array<i64: 1, 8, 256>}]} {
    %c0 = arith.constant 0 : index
    %c0_0 = arith.constant 0 : index
    %c0_1 = arith.constant 0 : index
    %0 = vector.load %arg1[%c0, %c0_0, %c0_1] : memref<1x8x256xf32, #tpu.memory_space<vmem>>, vector<1x8x256xf32>
    %1 = vector.shape_cast %0 : vector<1x8x256xf32> to vector<8x256xf32>
    %c0_2 = arith.constant 0 : index
    %c0_3 = arith.constant 0 : index
    %2 = vector.load %arg2[%c0_2, %c0_3] : memref<32x8xf32, #tpu.memory_space<vmem>>, vector<32x8xf32>
    %cst = arith.constant dense<0.000000e+00> : vector<32x256xf32>
    %3 = tpu.matmul %2, %1, %cst {dimension_numbers = #tpu.dot_dimension_numbers<[1], [0], [0], [1], [0, 0, 1, 1], [], []>, precision = #tpu.contract_precision<fp32>} : vector<32x8xf32>, vector<8x256xf32>, vector<32x256xf32> -> vector<32x256xf32>
    %c0_4 = arith.constant 0 : index
    %c0_5 = arith.constant 0 : index
    %4 = vector.load %arg3[%c0_4, %c0_5] : memref<32x2xf32, #tpu.memory_space<vmem>>, vector<32x1xf32>
    %5 = vector.broadcast %4 : vector<32x1xf32> to vector<32x256xf32>
    %6 = arith.mulf %3, %5 : vector<32x256xf32>
    %c0_6 = arith.constant 0 : index
    %c1 = arith.constant 1 : index
    %7 = vector.load %arg3[%c0_6, %c1] : memref<32x2xf32, #tpu.memory_space<vmem>>, vector<32x1xf32>
    %8 = vector.broadcast %7 : vector<32x1xf32> to vector<32x256xf32>
    %9 = arith.addf %6, %8 : vector<32x256xf32>
    %10 = arith.negf %9 : vector<32x256xf32>
    %11 = math.exp %10 : vector<32x256xf32>
    %cst_7 = arith.constant 1.000000e+00 : f32
    %12 = vector.broadcast %cst_7 : f32 to vector<32x256xf32>
    %13 = arith.addf %12, %11 : vector<32x256xf32>
    %14 = arith.divf %12, %13 : vector<32x256xf32>
    %15 = arith.mulf %9, %14 : vector<32x256xf32>
    %cst_8 = arith.constant 0.000000e+00 : f32
    %16 = vector.broadcast %cst_8 : f32 to vector<32x256xf32>
    %c17_i32 = arith.constant 17 : i32
    %17 = tpu.dynamic_rotate %15 by %c17_i32 dim 1 : vector<32x256xf32>, i32 -> vector<32x256xf32>
    %c0_9 = arith.constant 0 : index
    %c0_10 = arith.constant 0 : index
    %18 = vector.load %arg5[%c0_9, %c0_10] : memref<9x256xf32, #tpu.memory_space<vmem>>, vector<1x256xf32>
    %19 = vector.broadcast %18 : vector<1x256xf32> to vector<32x256xf32>
    %20 = arith.mulf %17, %19 : vector<32x256xf32>
    %c0_11 = arith.constant 0 : index
    %c0_12 = arith.constant 0 : index
    %21 = vector.load %arg4[%c0_11, %c0_12] : memref<32x9xf32, #tpu.memory_space<vmem>>, vector<32x1xf32>
    %22 = vector.broadcast %21 : vector<32x1xf32> to vector<32x256xf32>
    %23 = arith.mulf %20, %22 : vector<32x256xf32>
    %24 = arith.addf %16, %23 : vector<32x256xf32>
    %c16_i32 = arith.constant 16 : i32
    %25 = tpu.dynamic_rotate %15 by %c16_i32 dim 1 : vector<32x256xf32>, i32 -> vector<32x256xf32>
    %c1_13 = arith.constant 1 : index
    %c0_14 = arith.constant 0 : index
    %26 = vector.load %arg5[%c1_13, %c0_14] : memref<9x256xf32, #tpu.memory_space<vmem>>, vector<1x256xf32>
    %27 = vector.broadcast %26 : vector<1x256xf32> to vector<32x256xf32>
    %28 = arith.mulf %25, %27 : vector<32x256xf32>
    %c0_15 = arith.constant 0 : index
    %c1_16 = arith.constant 1 : index
    %29 = vector.load %arg4[%c0_15, %c1_16] : memref<32x9xf32, #tpu.memory_space<vmem>>, vector<32x1xf32>
    %30 = vector.broadcast %29 : vector<32x1xf32> to vector<32x256xf32>
    %31 = arith.mulf %28, %30 : vector<32x256xf32>
    %32 = arith.addf %24, %31 : vector<32x256xf32>
    %c15_i32 = arith.constant 15 : i32
    %33 = tpu.dynamic_rotate %15 by %c15_i32 dim 1 : vector<32x256xf32>, i32 -> vector<32x256xf32>
    %c2 = arith.constant 2 : index
    %c0_17 = arith.constant 0 : index
    %34 = vector.load %arg5[%c2, %c0_17] : memref<9x256xf32, #tpu.memory_space<vmem>>, vector<1x256xf32>
    %35 = vector.broadcast %34 : vector<1x256xf32> to vector<32x256xf32>
    %36 = arith.mulf %33, %35 : vector<32x256xf32>
    %c0_18 = arith.constant 0 : index
    %c2_19 = arith.constant 2 : index
    %37 = vector.load %arg4[%c0_18, %c2_19] : memref<32x9xf32, #tpu.memory_space<vmem>>, vector<32x1xf32>
    %38 = vector.broadcast %37 : vector<32x1xf32> to vector<32x256xf32>
    %39 = arith.mulf %36, %38 : vector<32x256xf32>
    %40 = arith.addf %32, %39 : vector<32x256xf32>
    %c1_i32 = arith.constant 1 : i32
    %41 = tpu.dynamic_rotate %15 by %c1_i32 dim 1 : vector<32x256xf32>, i32 -> vector<32x256xf32>
    %c3 = arith.constant 3 : index
    %c0_20 = arith.constant 0 : index
    %42 = vector.load %arg5[%c3, %c0_20] : memref<9x256xf32, #tpu.memory_space<vmem>>, vector<1x256xf32>
    %43 = vector.broadcast %42 : vector<1x256xf32> to vector<32x256xf32>
    %44 = arith.mulf %41, %43 : vector<32x256xf32>
    %c0_21 = arith.constant 0 : index
    %c3_22 = arith.constant 3 : index
    %45 = vector.load %arg4[%c0_21, %c3_22] : memref<32x9xf32, #tpu.memory_space<vmem>>, vector<32x1xf32>
    %46 = vector.broadcast %45 : vector<32x1xf32> to vector<32x256xf32>
    %47 = arith.mulf %44, %46 : vector<32x256xf32>
    %48 = arith.addf %40, %47 : vector<32x256xf32>
    %c4 = arith.constant 4 : index
    %c0_23 = arith.constant 0 : index
    %49 = vector.load %arg5[%c4, %c0_23] : memref<9x256xf32, #tpu.memory_space<vmem>>, vector<1x256xf32>
    %50 = vector.broadcast %49 : vector<1x256xf32> to vector<32x256xf32>
    %51 = arith.mulf %15, %50 : vector<32x256xf32>
    %c0_24 = arith.constant 0 : index
    %c4_25 = arith.constant 4 : index
    %52 = vector.load %arg4[%c0_24, %c4_25] : memref<32x9xf32, #tpu.memory_space<vmem>>, vector<32x1xf32>
    %53 = vector.broadcast %52 : vector<32x1xf32> to vector<32x256xf32>
    %54 = arith.mulf %51, %53 : vector<32x256xf32>
    %55 = arith.addf %48, %54 : vector<32x256xf32>
    %c255_i32 = arith.constant 255 : i32
    %56 = tpu.dynamic_rotate %15 by %c255_i32 dim 1 : vector<32x256xf32>, i32 -> vector<32x256xf32>
    %c5 = arith.constant 5 : index
    %c0_26 = arith.constant 0 : index
    %57 = vector.load %arg5[%c5, %c0_26] : memref<9x256xf32, #tpu.memory_space<vmem>>, vector<1x256xf32>
    %58 = vector.broadcast %57 : vector<1x256xf32> to vector<32x256xf32>
    %59 = arith.mulf %56, %58 : vector<32x256xf32>
    %c0_27 = arith.constant 0 : index
    %c5_28 = arith.constant 5 : index
    %60 = vector.load %arg4[%c0_27, %c5_28] : memref<32x9xf32, #tpu.memory_space<vmem>>, vector<32x1xf32>
    %61 = vector.broadcast %60 : vector<32x1xf32> to vector<32x256xf32>
    %62 = arith.mulf %59, %61 : vector<32x256xf32>
    %63 = arith.addf %55, %62 : vector<32x256xf32>
    %c241_i32 = arith.constant 241 : i32
    %64 = tpu.dynamic_rotate %15 by %c241_i32 dim 1 : vector<32x256xf32>, i32 -> vector<32x256xf32>
    %c6 = arith.constant 6 : index
    %c0_29 = arith.constant 0 : index
    %65 = vector.load %arg5[%c6, %c0_29] : memref<9x256xf32, #tpu.memory_space<vmem>>, vector<1x256xf32>
    %66 = vector.broadcast %65 : vector<1x256xf32> to vector<32x256xf32>
    %67 = arith.mulf %64, %66 : vector<32x256xf32>
    %c0_30 = arith.constant 0 : index
    %c6_31 = arith.constant 6 : index
    %68 = vector.load %arg4[%c0_30, %c6_31] : memref<32x9xf32, #tpu.memory_space<vmem>>, vector<32x1xf32>
    %69 = vector.broadcast %68 : vector<32x1xf32> to vector<32x256xf32>
    %70 = arith.mulf %67, %69 : vector<32x256xf32>
    %71 = arith.addf %63, %70 : vector<32x256xf32>
    %c240_i32 = arith.constant 240 : i32
    %72 = tpu.dynamic_rotate %15 by %c240_i32 dim 1 : vector<32x256xf32>, i32 -> vector<32x256xf32>
    %c7 = arith.constant 7 : index
    %c0_32 = arith.constant 0 : index
    %73 = vector.load %arg5[%c7, %c0_32] : memref<9x256xf32, #tpu.memory_space<vmem>>, vector<1x256xf32>
    %74 = vector.broadcast %73 : vector<1x256xf32> to vector<32x256xf32>
    %75 = arith.mulf %72, %74 : vector<32x256xf32>
    %c0_33 = arith.constant 0 : index
    %c7_34 = arith.constant 7 : index
    %76 = vector.load %arg4[%c0_33, %c7_34] : memref<32x9xf32, #tpu.memory_space<vmem>>, vector<32x1xf32>
    %77 = vector.broadcast %76 : vector<32x1xf32> to vector<32x256xf32>
    %78 = arith.mulf %75, %77 : vector<32x256xf32>
    %79 = arith.addf %71, %78 : vector<32x256xf32>
    %c239_i32 = arith.constant 239 : i32
    %80 = tpu.dynamic_rotate %15 by %c239_i32 dim 1 : vector<32x256xf32>, i32 -> vector<32x256xf32>
    %c8 = arith.constant 8 : index
    %c0_35 = arith.constant 0 : index
    %81 = vector.load %arg5[%c8, %c0_35] : memref<9x256xf32, #tpu.memory_space<vmem>>, vector<1x256xf32>
    %82 = vector.broadcast %81 : vector<1x256xf32> to vector<32x256xf32>
    %83 = arith.mulf %80, %82 : vector<32x256xf32>
    %c0_36 = arith.constant 0 : index
    %c8_37 = arith.constant 8 : index
    %84 = vector.load %arg4[%c0_36, %c8_37] : memref<32x9xf32, #tpu.memory_space<vmem>>, vector<32x1xf32>
    %85 = vector.broadcast %84 : vector<32x1xf32> to vector<32x256xf32>
    %86 = arith.mulf %83, %85 : vector<32x256xf32>
    %87 = arith.addf %79, %86 : vector<32x256xf32>
    %c0_38 = arith.constant 0 : index
    %c0_39 = arith.constant 0 : index
    %88 = vector.load %arg6[%c0_38, %c0_39] : memref<32x2xf32, #tpu.memory_space<vmem>>, vector<32x1xf32>
    %89 = vector.broadcast %88 : vector<32x1xf32> to vector<32x256xf32>
    %90 = arith.mulf %87, %89 : vector<32x256xf32>
    %c0_40 = arith.constant 0 : index
    %c1_41 = arith.constant 1 : index
    %91 = vector.load %arg6[%c0_40, %c1_41] : memref<32x2xf32, #tpu.memory_space<vmem>>, vector<32x1xf32>
    %92 = vector.broadcast %91 : vector<32x1xf32> to vector<32x256xf32>
    %93 = arith.addf %90, %92 : vector<32x256xf32>
    %94 = arith.negf %93 : vector<32x256xf32>
    %95 = math.exp %94 : vector<32x256xf32>
    %cst_42 = arith.constant 1.000000e+00 : f32
    %96 = vector.broadcast %cst_42 : f32 to vector<32x256xf32>
    %97 = arith.addf %96, %95 : vector<32x256xf32>
    %98 = arith.divf %96, %97 : vector<32x256xf32>
    %99 = arith.mulf %93, %98 : vector<32x256xf32>
    %c0_43 = arith.constant 0 : index
    %c0_44 = arith.constant 0 : index
    %100 = vector.load %arg7[%c0_43, %c0_44] : memref<1x256xf32, #tpu.memory_space<vmem>>, vector<1x256xf32>
    %101 = vector.broadcast %100 : vector<1x256xf32> to vector<32x256xf32>
    %102 = arith.mulf %99, %101 : vector<32x256xf32>
    %cst_45 = arith.constant dense<0.000000e+00> : vector<32xf32>
    %103 = vector.multi_reduction <add>, %102, %cst_45 [1] : vector<32x256xf32> to vector<32xf32>
    %104 = vector.shape_cast %103 : vector<32xf32> to vector<32x1xf32>
    %c0_46 = arith.constant 0 : index
    %c0_47 = arith.constant 0 : index
    %105 = vector.load %arg8[%c0_46, %c0_47] : memref<32x2xf32, #tpu.memory_space<vmem>>, vector<32x2xf32>
    %106 = vector.broadcast %104 : vector<32x1xf32> to vector<32x2xf32>
    %107 = arith.mulf %106, %105 : vector<32x2xf32>
    %cst_48 = arith.constant dense<0.000000e+00> : vector<2xf32>
    %108 = vector.multi_reduction <add>, %107, %cst_48 [0] : vector<32x2xf32> to vector<2xf32>
    %109 = vector.shape_cast %108 : vector<2xf32> to vector<1x2xf32>
    %c0_49 = arith.constant 0 : index
    %c0_50 = arith.constant 0 : index
    %110 = vector.load %arg9[%c0_49, %c0_50] : memref<1x2xf32, #tpu.memory_space<vmem>>, vector<1x2xf32>
    %111 = arith.addf %109, %110 : vector<1x2xf32>
    %112 = arith.negf %111 : vector<1x2xf32>
    %113 = math.exp %112 : vector<1x2xf32>
    %cst_51 = arith.constant 1.000000e+00 : f32
    %114 = vector.broadcast %cst_51 : f32 to vector<1x2xf32>
    %115 = arith.addf %114, %113 : vector<1x2xf32>
    %116 = arith.divf %114, %115 : vector<1x2xf32>
    %117 = arith.mulf %111, %116 : vector<1x2xf32>
    %c0_52 = arith.constant 0 : index
    %c0_53 = arith.constant 0 : index
    %118 = vector.load %arg10[%c0_52, %c0_53] : memref<32x2xf32, #tpu.memory_space<vmem>>, vector<32x2xf32>
    %119 = vector.broadcast %117 : vector<1x2xf32> to vector<32x2xf32>
    %120 = arith.mulf %119, %118 : vector<32x2xf32>
    %cst_54 = arith.constant dense<0.000000e+00> : vector<32xf32>
    %121 = vector.multi_reduction <add>, %120, %cst_54 [1] : vector<32x2xf32> to vector<32xf32>
    %122 = vector.shape_cast %121 : vector<32xf32> to vector<32x1xf32>
    %c0_55 = arith.constant 0 : index
    %c0_56 = arith.constant 0 : index
    %123 = vector.load %arg11[%c0_55, %c0_56] : memref<32x1xf32, #tpu.memory_space<vmem>>, vector<32x1xf32>
    %124 = arith.addf %122, %123 : vector<32x1xf32>
    %125 = arith.negf %124 : vector<32x1xf32>
    %126 = math.exp %125 : vector<32x1xf32>
    %cst_57 = arith.constant 1.000000e+00 : f32
    %127 = vector.broadcast %cst_57 : f32 to vector<32x1xf32>
    %128 = arith.addf %127, %126 : vector<32x1xf32>
    %129 = arith.divf %127, %128 : vector<32x1xf32>
    %130 = vector.broadcast %129 : vector<32x1xf32> to vector<32x256xf32>
    %131 = arith.mulf %99, %130 : vector<32x256xf32>
    %c0_58 = arith.constant 0 : index
    %c0_59 = arith.constant 0 : index
    %132 = vector.load %arg12[%c0_58, %c0_59] : memref<8x32xf32, #tpu.memory_space<vmem>>, vector<8x32xf32>
    %cst_60 = arith.constant dense<0.000000e+00> : vector<8x256xf32>
    %133 = tpu.matmul %132, %131, %cst_60 {dimension_numbers = #tpu.dot_dimension_numbers<[1], [0], [0], [1], [0, 0, 1, 1], [], []>, precision = #tpu.contract_precision<fp32>} : vector<8x32xf32>, vector<32x256xf32>, vector<8x256xf32> -> vector<8x256xf32>
    %c0_61 = arith.constant 0 : index
    %c0_62 = arith.constant 0 : index
    %134 = vector.load %arg13[%c0_61, %c0_62] : memref<8x2xf32, #tpu.memory_space<vmem>>, vector<8x1xf32>
    %135 = vector.broadcast %134 : vector<8x1xf32> to vector<8x256xf32>
    %136 = arith.mulf %133, %135 : vector<8x256xf32>
    %c0_63 = arith.constant 0 : index
    %c1_64 = arith.constant 1 : index
    %137 = vector.load %arg13[%c0_63, %c1_64] : memref<8x2xf32, #tpu.memory_space<vmem>>, vector<8x1xf32>
    %138 = vector.broadcast %137 : vector<8x1xf32> to vector<8x256xf32>
    %139 = arith.addf %136, %138 : vector<8x256xf32>
    %140 = arith.addf %139, %1 : vector<8x256xf32>
    %c0_65 = arith.constant 0 : index
    %c0_66 = arith.constant 0 : index
    %c0_67 = arith.constant 0 : index
    %141 = vector.load %arg14[%c0_65, %c0_66, %c0_67] : memref<1x8x256xf32, #tpu.memory_space<vmem>>, vector<1x8x256xf32>
    %142 = vector.shape_cast %141 : vector<1x8x256xf32> to vector<8x256xf32>
    %143 = vector.shape_cast %140 : vector<8x256xf32> to vector<1x8x256xf32>
    tpu.vector_store %arg14[%c0_65, %c0_66, %c0_67], %143 {strides = array<i32>} : memref<1x8x256xf32, #tpu.memory_space<vmem>>, vector<1x8x256xf32>,
    return
  }
  func.func @transform_0(%arg0: i32) -> (i32, i32, i32) {
    %c0_i32 = arith.constant 0 : i32
    %c0_i32_0 = arith.constant 0 : i32
    %c0_i32_1 = arith.constant 0 : i32
    return %arg0, %c0_i32, %c0_i32_0 : i32, i32, i32
  }
  func.func @transform_1(%arg0: i32) -> (i32, i32) {
    %c0_i32 = arith.constant 0 : i32
    %c0_i32_0 = arith.constant 0 : i32
    %c0_i32_1 = arith.constant 0 : i32
    return %c0_i32, %c0_i32_0 : i32, i32
  }
  func.func @transform_2(%arg0: i32) -> (i32, i32) {
    %c0_i32 = arith.constant 0 : i32
    %c0_i32_0 = arith.constant 0 : i32
    %c0_i32_1 = arith.constant 0 : i32
    return %c0_i32, %c0_i32_0 : i32, i32
  }
  func.func @transform_3(%arg0: i32) -> (i32, i32) {
    %c0_i32 = arith.constant 0 : i32
    %c0_i32_0 = arith.constant 0 : i32
    %c0_i32_1 = arith.constant 0 : i32
    return %c0_i32, %c0_i32_0 : i32, i32
  }
  func.func @transform_4(%arg0: i32) -> (i32, i32) {
    %c0_i32 = arith.constant 0 : i32
    %c0_i32_0 = arith.constant 0 : i32
    %c0_i32_1 = arith.constant 0 : i32
    return %c0_i32, %c0_i32_0 : i32, i32
  }
  func.func @transform_5(%arg0: i32) -> (i32, i32) {
    %c0_i32 = arith.constant 0 : i32
    %c0_i32_0 = arith.constant 0 : i32
    %c0_i32_1 = arith.constant 0 : i32
    return %c0_i32, %c0_i32_0 : i32, i32
  }
  func.func @transform_6(%arg0: i32) -> (i32, i32) {
    %c0_i32 = arith.constant 0 : i32
    %c0_i32_0 = arith.constant 0 : i32
    %c0_i32_1 = arith.constant 0 : i32
    return %c0_i32, %c0_i32_0 : i32, i32
  }
  func.func @transform_7(%arg0: i32) -> (i32, i32) {
    %c0_i32 = arith.constant 0 : i32
    %c0_i32_0 = arith.constant 0 : i32
    %c0_i32_1 = arith.constant 0 : i32
    return %c0_i32, %c0_i32_0 : i32, i32
  }
  func.func @transform_8(%arg0: i32) -> (i32, i32) {
    %c0_i32 = arith.constant 0 : i32
    %c0_i32_0 = arith.constant 0 : i32
    %c0_i32_1 = arith.constant 0 : i32
    return %c0_i32, %c0_i32_0 : i32, i32
  }
  func.func @transform_9(%arg0: i32) -> (i32, i32) {
    %c0_i32 = arith.constant 0 : i32
    %c0_i32_0 = arith.constant 0 : i32
    %c0_i32_1 = arith.constant 0 : i32
    return %c0_i32, %c0_i32_0 : i32, i32
  }
  func.func @transform_10(%arg0: i32) -> (i32, i32) {
    %c0_i32 = arith.constant 0 : i32
    %c0_i32_0 = arith.constant 0 : i32
    %c0_i32_1 = arith.constant 0 : i32
    return %c0_i32, %c0_i32_0 : i32, i32
  }
  func.func @transform_11(%arg0: i32) -> (i32, i32) {
    %c0_i32 = arith.constant 0 : i32
    %c0_i32_0 = arith.constant 0 : i32
    %c0_i32_1 = arith.constant 0 : i32
    return %c0_i32, %c0_i32_0 : i32, i32
  }
  func.func @transform_12(%arg0: i32) -> (i32, i32) {
    %c0_i32 = arith.constant 0 : i32
    %c0_i32_0 = arith.constant 0 : i32
    %c0_i32_1 = arith.constant 0 : i32
    return %c0_i32, %c0_i32_0 : i32, i32
  }
  func.func @transform_13(%arg0: i32) -> (i32, i32, i32) {
    %c0_i32 = arith.constant 0 : i32
    %c0_i32_0 = arith.constant 0 : i32
    %c0_i32_1 = arith.constant 0 : i32
    return %arg0, %c0_i32, %c0_i32_0 : i32, i32, i32
  }
}

</mosaic_0001>

<llo_original>
// kernel: mbconv_forward.1
$region0: #{mbconv_forward.1}
  #allocation0 [shape = 'u32[]', space=smem, size = 0x4, offset = 0x4, fixed_abs, tag = 'smem constant byte address 0x4 - core index']
  #allocation1 [shape = 'u32[144,128]{1,0:T(1,128)}', space=vmem, size = 0x12000, scoped, tag = 'internal scratch']
  %s0 = inlined_call_operand.vmem [shape: f32[2,8,256], index: 0, kind: input, shape index: {}]
  %s1 = inlined_call_operand.vmem [shape: f32[32,8], index: 1, kind: input, shape index: {}]
  %s2 = inlined_call_operand.vmem [shape: f32[32,2], index: 2, kind: input, shape index: {}]
  %s3 = inlined_call_operand.vmem [shape: f32[32,9], index: 3, kind: input, shape index: {}]
  %s4 = inlined_call_operand.vmem [shape: f32[9,256], index: 4, kind: input, shape index: {}]
  %s5 = inlined_call_operand.vmem [shape: f32[32,2], index: 5, kind: input, shape index: {}]
  %s6 = inlined_call_operand.vmem [shape: f32[1,256], index: 6, kind: input, shape index: {}]
  %s7 = inlined_call_operand.vmem [shape: f32[32,2], index: 7, kind: input, shape index: {}]
  %s8 = inlined_call_operand.vmem [shape: f32[1,2], index: 8, kind: input, shape index: {}]
  %s9 = inlined_call_operand.vmem [shape: f32[32,2], index: 9, kind: input, shape index: {}]
  %s10 = inlined_call_operand.vmem [shape: f32[32,1], index: 10, kind: input, shape index: {}]
  %s11 = inlined_call_operand.vmem [shape: f32[8,32], index: 11, kind: input, shape index: {}]
  %s12 = inlined_call_operand.vmem [shape: f32[8,2], index: 12, kind: input, shape index: {}]
  %s13 = inlined_call_operand.vmem [shape: f32[2,8,256], index: 13, kind: output, shape index: {}]
  %s14 = sld [smem:[#allocation0]]
  $region85: #{mbconv_forward.1} parent=0
    _
  %s16 = ssub.s32 1, %s14
  %s17 = scalar_select 0, %s16, %s14
  loop: start=0, step=1, limit=4
  $region2: #{mbconv_forward.1} parent=0 // loop_pre_header
    _
  $region3: #{mbconv_forward.1} parent=0 // loop_header
    %s19 = sphi 0, %s23
    %p20 = scmp.ge.s32.totalorder %s19, 4
    %s29 = sphi 0, %s31
    %s32 = sphi 0, %s29
    %s33 = sphi 0, %s32
    %s49 = sphi 0, %s33
    %s53 = sphi 0, %s53
    %s55 = sphi 0, %s53
    %s56 = sphi 0, %s55
    %s70 = sphi 0, %s56
    %s74 = sphi 0, %s74
    %s76 = sphi 0, %s74
    %s77 = sphi 0, %s76
    %s91 = sphi 0, %s77
    %s95 = sphi 0, %s95
    %s97 = sphi 0, %s95
    %s98 = sphi 0, %s97
    %s112 = sphi 0, %s98
    %s116 = sphi 0, %s116
    %s118 = sphi 0, %s116
    %s119 = sphi 0, %s118
    %s133 = sphi 0, %s119
    %s137 = sphi 0, %s137
    %s139 = sphi 0, %s137
    %s140 = sphi 0, %s139
    %s154 = sphi 0, %s140
    %s158 = sphi 0, %s158
    %s160 = sphi 0, %s158
    %s161 = sphi 0, %s160
    %s175 = sphi 0, %s161
    %s179 = sphi 0, %s179
    %s181 = sphi 0, %s179
    %s182 = sphi 0, %s181
    %s196 = sphi 0, %s182
    %s200 = sphi 0, %s200
    %s202 = sphi 0, %s200
    %s203 = sphi 0, %s202
    %s217 = sphi 0, %s203
    %s221 = sphi 0, %s221
    %s223 = sphi 0, %s221
    %s224 = sphi 0, %s223
    %s238 = sphi 0, %s224
    %s242 = sphi 0, %s242
    %s244 = sphi 0, %s242
    %s245 = sphi 0, %s244
    %s259 = sphi 0, %s245
    %s263 = sphi 0, %s263
    %s265 = sphi 0, %s263
    %s266 = sphi 0, %s265
    %s280 = sphi 0, %s266
    %s284 = sphi 0, %s284
    %s286 = sphi 0, %s284
    %s287 = sphi 0, %s286
    %s301 = sphi 0, %s287
    %s307 = sphi 0, %s309
    %s310 = sphi 0, %s307
    %s311 = sphi 0, %s310
    %s327 = sphi 0, %s311
  $region4: #{mbconv_forward.1} parent=0 // loop_header_branch
    %22 = sbr.rel (%p20) target = $region8
  $region5: #{mbconv_forward.1} parent=0 // loop_body
    %s24 = ssub.s32 %s19, 1
    %s25 = ssub.s32 %s19, 2
    %s26 = sadd.s32 %s19, 1
    %s27 = ssub.s32 %s19, %s26
    %p28 = scmp.eq.s32.totalorder %s27, 0
    %s30 = sadd.s32 %s29, 1
    %s31 = scalar_select %p28, %s29, %s30
    %p34 = pneg %p28
    %p35 = scmp.eq.s32.totalorder %s19, 1
    %p36 = por %p34, %p35
    %p37 = scmp.ne.s32.totalorder %s29, %s32
    %p38 = scmp.eq.s32.totalorder %s19, 0
    %p39 = por %p37, %p38
    %p40 = scmp.ne.s32.totalorder %s29, %s32
    %p41 = scmp.eq.s32.totalorder %s24, 1
    %p42 = por %p40, %p41
    %p43 = scmp.ne.s32.totalorder %s32, %s33
    %p44 = scmp.eq.s32.totalorder %s24, 0
    %p45 = por %p43, %p44
    %p46 = scmp.ne.s32.totalorder %s32, %s33
    %p47 = scmp.eq.s32.totalorder %s25, 1
    %p48 = por %p46, %p47
    %p50 = scmp.ne.s32.totalorder %s33, %s49
    %p51 = scmp.eq.s32.totalorder %s25, 0
    %p52 = por %p50, %p51
    %s54 = sadd.s32 %s53, 1
    %p57 = scmp.eq.s32.totalorder %s19, 1
    %p58 = scmp.ne.s32.totalorder %s53, %s55
    %p59 = scmp.eq.s32.totalorder %s19, 0
    %p60 = por %p58, %p59
    %p61 = scmp.ne.s32.totalorder %s53, %s55
    %p62 = scmp.eq.s32.totalorder %s24, 1
    %p63 = por %p61, %p62
    %p64 = scmp.ne.s32.totalorder %s55, %s56
    %p65 = scmp.eq.s32.totalorder %s24, 0
    %p66 = por %p64, %p65
    %p67 = scmp.ne.s32.totalorder %s55, %s56
    %p68 = scmp.eq.s32.totalorder %s25, 1
    %p69 = por %p67, %p68
    %p71 = scmp.ne.s32.totalorder %s56, %s70
    %p72 = scmp.eq.s32.totalorder %s25, 0
    %p73 = por %p71, %p72
    %s75 = sadd.s32 %s74, 1
    %p78 = scmp.eq.s32.totalorder %s19, 1
    %p79 = scmp.ne.s32.totalorder %s74, %s76
    %p80 = scmp.eq.s32.totalorder %s19, 0
    %p81 = por %p79, %p80
    %p82 = scmp.ne.s32.totalorder %s74, %s76
    %p83 = scmp.eq.s32.totalorder %s24, 1
    %p84 = por %p82, %p83
    %p85 = scmp.ne.s32.totalorder %s76, %s77
    %p86 = scmp.eq.s32.totalorder %s24, 0
    %p87 = por %p85, %p86
    %p88 = scmp.ne.s32.totalorder %s76, %s77
    %p89 = scmp.eq.s32.totalorder %s25, 1
    %p90 = por %p88, %p89
    %p92 = scmp.ne.s32.totalorder %s77, %s91
    %p93 = scmp.eq.s32.totalorder %s25, 0
    %p94 = por %p92, %p93
    %s96 = sadd.s32 %s95, 1
    %p99 = scmp.eq.s32.totalorder %s19, 1
    %p100 = scmp.ne.s32.totalorder %s95, %s97
    %p101 = scmp.eq.s32.totalorder %s19, 0
    %p102 = por %p100, %p101
    %p103 = scmp.ne.s32.totalorder %s95, %s97
    %p104 = scmp.eq.s32.totalorder %s24, 1
    %p105 = por %p103, %p104
    %p106 = scmp.ne.s32.totalorder %s97, %s98
    %p107 = scmp.eq.s32.totalorder %s24, 0
    %p108 = por %p106, %p107
    %p109 = scmp.ne.s32.totalorder %s97, %s98
    %p110 = scmp.eq.s32.totalorder %s25, 1
    %p111 = por %p109, %p110
    %p113 = scmp.ne.s32.totalorder %s98, %s112
    %p114 = scmp.eq.s32.totalorder %s25, 0
    %p115 = por %p113, %p114
    %s117 = sadd.s32 %s116, 1
    %p120 = scmp.eq.s32.totalorder %s19, 1
    %p121 = scmp.ne.s32.totalorder %s116, %s118
    %p122 = scmp.eq.s32.totalorder %s19, 0
    %p123 = por %p121, %p122
    %p124 = scmp.ne.s32.totalorder %s116, %s118
    %p125 = scmp.eq.s32.totalorder %s24, 1
    %p126 = por %p124, %p125
    %p127 = scmp.ne.s32.totalorder %s118, %s119
    %p128 = scmp.eq.s32.totalorder %s24, 0
    %p129 = por %p127, %p128
    %p130 = scmp.ne.s32.totalorder %s118, %s119
    %p131 = scmp.eq.s32.totalorder %s25, 1
    %p132 = por %p130, %p131
    %p134 = scmp.ne.s32.totalorder %s119, %s133
    %p135 = scmp.eq.s32.totalorder %s25, 0
    %p136 = por %p134, %p135
    %s138 = sadd.s32 %s137, 1
    %p141 = scmp.eq.s32.totalorder %s19, 1
    %p142 = scmp.ne.s32.totalorder %s137, %s139
    %p143 = scmp.eq.s32.totalorder %s19, 0
    %p144 = por %p142, %p143
    %p145 = scmp.ne.s32.totalorder %s137, %s139
    %p146 = scmp.eq.s32.totalorder %s24, 1
    %p147 = por %p145, %p146
    %p148 = scmp.ne.s32.totalorder %s139, %s140
    %p149 = scmp.eq.s32.totalorder %s24, 0
    %p150 = por %p148, %p149
    %p151 = scmp.ne.s32.totalorder %s139, %s140
    %p152 = scmp.eq.s32.totalorder %s25, 1
    %p153 = por %p151, %p152
    %p155 = scmp.ne.s32.totalorder %s140, %s154
    %p156 = scmp.eq.s32.totalorder %s25, 0
    %p157 = por %p155, %p156
    %s159 = sadd.s32 %s158, 1
    %p162 = scmp.eq.s32.totalorder %s19, 1
    %p163 = scmp.ne.s32.totalorder %s158, %s160
    %p164 = scmp.eq.s32.totalorder %s19, 0
    %p165 = por %p163, %p164
    %p166 = scmp.ne.s32.totalorder %s158, %s160
    %p167 = scmp.eq.s32.totalorder %s24, 1
    %p168 = por %p166, %p167
    %p169 = scmp.ne.s32.totalorder %s160, %s161
    %p170 = scmp.eq.s32.totalorder %s24, 0
    %p171 = por %p169, %p170
    %p172 = scmp.ne.s32.totalorder %s160, %s161
    %p173 = scmp.eq.s32.totalorder %s25, 1
    %p174 = por %p172, %p173
    %p176 = scmp.ne.s32.totalorder %s161, %s175
    %p177 = scmp.eq.s32.totalorder %s25, 0
    %p178 = por %p176, %p177
    %s180 = sadd.s32 %s179, 1
    %p183 = scmp.eq.s32.totalorder %s19, 1
    %p184 = scmp.ne.s32.totalorder %s179, %s181
    %p185 = scmp.eq.s32.totalorder %s19, 0
    %p186 = por %p184, %p185
    %p187 = scmp.ne.s32.totalorder %s179, %s181
    %p188 = scmp.eq.s32.totalorder %s24, 1
    %p189 = por %p187, %p188
    %p190 = scmp.ne.s32.totalorder %s181, %s182
    %p191 = scmp.eq.s32.totalorder %s24, 0
    %p192 = por %p190, %p191
    %p193 = scmp.ne.s32.totalorder %s181, %s182
    %p194 = scmp.eq.s32.totalorder %s25, 1
    %p195 = por %p193, %p194
    %p197 = scmp.ne.s32.totalorder %s182, %s196
    %p198 = scmp.eq.s32.totalorder %s25, 0
    %p199 = por %p197, %p198
    %s201 = sadd.s32 %s200, 1
    %p204 = scmp.eq.s32.totalorder %s19, 1
    %p205 = scmp.ne.s32.totalorder %s200, %s202
    %p206 = scmp.eq.s32.totalorder %s19, 0
    %p207 = por %p205, %p206
    %p208 = scmp.ne.s32.totalorder %s200, %s202
    %p209 = scmp.eq.s32.totalorder %s24, 1
    %p210 = por %p208, %p209
    %p211 = scmp.ne.s32.totalorder %s202, %s203
    %p212 = scmp.eq.s32.totalorder %s24, 0
    %p213 = por %p211, %p212
    %p214 = scmp.ne.s32.totalorder %s202, %s203
    %p215 = scmp.eq.s32.totalorder %s25, 1
    %p216 = por %p214, %p215
    %p218 = scmp.ne.s32.totalorder %s203, %s217
    %p219 = scmp.eq.s32.totalorder %s25, 0
    %p220 = por %p218, %p219
    %s222 = sadd.s32 %s221, 1
    %p225 = scmp.eq.s32.totalorder %s19, 1
    %p226 = scmp.ne.s32.totalorder %s221, %s223
    %p227 = scmp.eq.s32.totalorder %s19, 0
    %p228 = por %p226, %p227
    %p229 = scmp.ne.s32.totalorder %s221, %s223
    %p230 = scmp.eq.s32.totalorder %s24, 1
    %p231 = por %p229, %p230
    %p232 = scmp.ne.s32.totalorder %s223, %s224
    %p233 = scmp.eq.s32.totalorder %s24, 0
    %p234 = por %p232, %p233
    %p235 = scmp.ne.s32.totalorder %s223, %s224
    %p236 = scmp.eq.s32.totalorder %s25, 1
    %p237 = por %p235, %p236
    %p239 = scmp.ne.s32.totalorder %s224, %s238
    %p240 = scmp.eq.s32.totalorder %s25, 0
    %p241 = por %p239, %p240
    %s243 = sadd.s32 %s242, 1
    %p246 = scmp.eq.s32.totalorder %s19, 1
    %p247 = scmp.ne.s32.totalorder %s242, %s244
    %p248 = scmp.eq.s32.totalorder %s19, 0
    %p249 = por %p247, %p248
    %p250 = scmp.ne.s32.totalorder %s242, %s244
    %p251 = scmp.eq.s32.totalorder %s24, 1
    %p252 = por %p250, %p251
    %p253 = scmp.ne.s32.totalorder %s244, %s245
    %p254 = scmp.eq.s32.totalorder %s24, 0
    %p255 = por %p253, %p254
    %p256 = scmp.ne.s32.totalorder %s244, %s245
    %p257 = scmp.eq.s32.totalorder %s25, 1
    %p258 = por %p256, %p257
    %p260 = scmp.ne.s32.totalorder %s245, %s259
    %p261 = scmp.eq.s32.totalorder %s25, 0
    %p262 = por %p260, %p261
    %s264 = sadd.s32 %s263, 1
    %p267 = scmp.eq.s32.totalorder %s19, 1
    %p268 = scmp.ne.s32.totalorder %s263, %s265
    %p269 = scmp.eq.s32.totalorder %s19, 0
    %p270 = por %p268, %p269
    %p271 = scmp.ne.s32.totalorder %s263, %s265
    %p272 = scmp.eq.s32.totalorder %s24, 1
    %p273 = por %p271, %p272
    %p274 = scmp.ne.s32.totalorder %s265, %s266
    %p275 = scmp.eq.s32.totalorder %s24, 0
    %p276 = por %p274, %p275
    %p277 = scmp.ne.s32.totalorder %s265, %s266
    %p278 = scmp.eq.s32.totalorder %s25, 1
    %p279 = por %p277, %p278
    %p281 = scmp.ne.s32.totalorder %s266, %s280
    %p282 = scmp.eq.s32.totalorder %s25, 0
    %p283 = por %p281, %p282
    %s285 = sadd.s32 %s284, 1
    %p288 = scmp.eq.s32.totalorder %s19, 1
    %p289 = scmp.ne.s32.totalorder %s284, %s286
    %p290 = scmp.eq.s32.totalorder %s19, 0
    %p291 = por %p289, %p290
    %p292 = scmp.ne.s32.totalorder %s284, %s286
    %p293 = scmp.eq.s32.totalorder %s24, 1
    %p294 = por %p292, %p293
    %p295 = scmp.ne.s32.totalorder %s286, %s287
    %p296 = scmp.eq.s32.totalorder %s24, 0
    %p297 = por %p295, %p296
    %p298 = scmp.ne.s32.totalorder %s286, %s287
    %p299 = scmp.eq.s32.totalorder %s25, 1
    %p300 = por %p298, %p299
    %p302 = scmp.ne.s32.totalorder %s287, %s301
    %p303 = scmp.eq.s32.totalorder %s25, 0
    %p304 = por %p302, %p303
    %s305 = ssub.s32 %s19, %s26
    %p306 = scmp.eq.s32.totalorder %s305, 0
    %s308 = sadd.s32 %s307, 1
    %s309 = scalar_select %p306, %s307, %s308
    %p312 = pneg %p306
    %p313 = scmp.eq.s32.totalorder %s19, 1
    %p314 = por %p312, %p313
    %p315 = scmp.ne.s32.totalorder %s307, %s310
    %p316 = scmp.eq.s32.totalorder %s19, 0
    %p317 = por %p315, %p316
    %p318 = scmp.ne.s32.totalorder %s307, %s310
    %p319 = scmp.eq.s32.totalorder %s24, 1
    %p320 = por %p318, %p319
    %p321 = scmp.ne.s32.totalorder %s310, %s311
    %p322 = scmp.eq.s32.totalorder %s24, 0
    %p323 = por %p321, %p322
    %p324 = scmp.ne.s32.totalorder %s310, %s311
    %p325 = scmp.eq.s32.totalorder %s25, 1
    %p326 = por %p324, %p325
    %p328 = scmp.ne.s32.totalorder %s311, %s327
    %p329 = scmp.eq.s32.totalorder %s25, 0
    %p330 = por %p328, %p329
    %p331 = scmp.le.s32.totalorder 1, %s19
    %p332 = scmp.lt.s32.totalorder %s19, 3
    %p333 = pnand %p331, %p332
    %p334 = pneg %p333
    // Predicated region
    $region9: #{mbconv_forward.1} parent=5 // pred_check
      _
    $region10: #{mbconv_forward.1} parent=5 // pred_check_branch
      %336 = sbr.rel (%p333) target = $region12
    $region11: #{mbconv_forward.1} parent=5 // pred_region
      %s337 = ssub.s32 %s19, 1
      // Predicated region
      $region13: #{mbconv_forward.1} parent=11 // pred_check
        %p338 = pneg %p66
      $region14: #{mbconv_forward.1} parent=11 // pred_check_branch
        %340 = sbr.rel (%p338) target = $region16
      $region15: #{mbconv_forward.1} parent=11 // pred_region
        _
      $region16: #{mbconv_forward.1} parent=11 // pred_fallthru
        _
      // Predicated region
      $region17: #{mbconv_forward.1} parent=11 // pred_check
        %p341 = pneg %p87
      $region18: #{mbconv_forward.1} parent=11 // pred_check_branch
        %343 = sbr.rel (%p341) target = $region20
      $region19: #{mbconv_forward.1} parent=11 // pred_region
        _
      $region20: #{mbconv_forward.1} parent=11 // pred_fallthru
        _
      // Predicated region
      $region21: #{mbconv_forward.1} parent=11 // pred_check
        %p344 = pneg %p108
      $region22: #{mbconv_forward.1} parent=11 // pred_check_branch
        %346 = sbr.rel (%p344) target = $region24
      $region23: #{mbconv_forward.1} parent=11 // pred_region
        _
      $region24: #{mbconv_forward.1} parent=11 // pred_fallthru
        _
      // Predicated region
      $region25: #{mbconv_forward.1} parent=11 // pred_check
        %p347 = pneg %p129
      $region26: #{mbconv_forward.1} parent=11 // pred_check_branch
        %349 = sbr.rel (%p347) target = $region28
      $region27: #{mbconv_forward.1} parent=11 // pred_region
        _
      $region28: #{mbconv_forward.1} parent=11 // pred_fallthru
        _
      // Predicated region
      $region29: #{mbconv_forward.1} parent=11 // pred_check
        %p350 = pneg %p150
      $region30: #{mbconv_forward.1} parent=11 // pred_check_branch
        %352 = sbr.rel (%p350) target = $region32
      $region31: #{mbconv_forward.1} parent=11 // pred_region
        _
      $region32: #{mbconv_forward.1} parent=11 // pred_fallthru
        _
      // Predicated region
      $region33: #{mbconv_forward.1} parent=11 // pred_check
        %p353 = pneg %p171
      $region34: #{mbconv_forward.1} parent=11 // pred_check_branch
        %355 = sbr.rel (%p353) target = $region36
      $region35: #{mbconv_forward.1} parent=11 // pred_region
        _
      $region36: #{mbconv_forward.1} parent=11 // pred_fallthru
        _
      // Predicated region
      $region37: #{mbconv_forward.1} parent=11 // pred_check
        %p356 = pneg %p192
      $region38: #{mbconv_forward.1} parent=11 // pred_check_branch
        %358 = sbr.rel (%p356) target = $region40
      $region39: #{mbconv_forward.1} parent=11 // pred_region
        _
      $region40: #{mbconv_forward.1} parent=11 // pred_fallthru
        _
      // Predicated region
      $region41: #{mbconv_forward.1} parent=11 // pred_check
        %p359 = pneg %p213
      $region42: #{mbconv_forward.1} parent=11 // pred_check_branch
        %361 = sbr.rel (%p359) target = $region44
      $region43: #{mbconv_forward.1} parent=11 // pred_region
        _
      $region44: #{mbconv_forward.1} parent=11 // pred_fallthru
        _
      // Predicated region
      $region45: #{mbconv_forward.1} parent=11 // pred_check
        %p362 = pneg %p234
      $region46: #{mbconv_forward.1} parent=11 // pred_check_branch
        %364 = sbr.rel (%p362) target = $region48
      $region47: #{mbconv_forward.1} parent=11 // pred_region
        _
      $region48: #{mbconv_forward.1} parent=11 // pred_fallthru
        _
      // Predicated region
      $region49: #{mbconv_forward.1} parent=11 // pred_check
        %p365 = pneg %p255
      $region50: #{mbconv_forward.1} parent=11 // pred_check_branch
        %367 = sbr.rel (%p365) target = $region52
      $region51: #{mbconv_forward.1} parent=11 // pred_region
        _
      $region52: #{mbconv_forward.1} parent=11 // pred_fallthru
        _
      // Predicated region
      $region53: #{mbconv_forward.1} parent=11 // pred_check
        %p368 = pneg %p276
      $region54: #{mbconv_forward.1} parent=11 // pred_check_branch
        %370 = sbr.rel (%p368) target = $region56
      $region55: #{mbconv_forward.1} parent=11 // pred_region
        _
      $region56: #{mbconv_forward.1} parent=11 // pred_fallthru
        _
      // Predicated region
      $region57: #{mbconv_forward.1} parent=11 // pred_check
        %p371 = pneg %p297
      $region58: #{mbconv_forward.1} parent=11 // pred_check_branch
        %373 = sbr.rel (%p371) target = $region60
      $region59: #{mbconv_forward.1} parent=11 // pred_region
        _
      $region60: #{mbconv_forward.1} parent=11 // pred_fallthru
        _
    $region12: #{mbconv_forward.1} parent=5 // pred_fallthru
      _
    %p374 = scmp.lt.s32.totalorder %s19, 2
    // Predicated region
    $region61: #{mbconv_forward.1} parent=5 // pred_check
      %p375 = pneg %p374
    $region62: #{mbconv_forward.1} parent=5 // pred_check_branch
      %377 = sbr.rel (%p375) target = $region64
    $region63: #{mbconv_forward.1} parent=5 // pred_region
      // Predicated region
      $region65: #{mbconv_forward.1} parent=63 // pred_check
        %p378 = pneg %p39
      $region66: #{mbconv_forward.1} parent=63 // pred_check_branch
        %380 = sbr.rel (%p378) target = $region68
      $region67: #{mbconv_forward.1} parent=63 // pred_region
        %p381 = scmp.lt.s32.totalorder %s19, 1
        %s382 = scalar_select %p381, %s19, 1
        %s383 = smul.addr %s382, 2
        %s384 = smul.addr %s383, 8
        %s385 = scalar_lea.vmem %s0, %s384
      $region68: #{mbconv_forward.1} parent=63 // pred_fallthru
        _
    $region64: #{mbconv_forward.1} parent=5 // pred_fallthru
      _
    %p386 = scmp.le.s32.totalorder 1, %s19
    %p387 = scmp.lt.s32.totalorder %s19, 3
    %p388 = pnand %p386, %p387
    %p389 = pneg %p388
    // Predicated region
    $region69: #{mbconv_forward.1} parent=5 // pred_check
      _
    $region70: #{mbconv_forward.1} parent=5 // pred_check_branch
      %391 = sbr.rel (%p388) target = $region72
    $region71: #{mbconv_forward.1} parent=5 // pred_region
      %s392 = ssub.s32 %s19, 1
      %p393 = scmp.lt.s32.totalorder %s24, 1
      %s394 = scalar_select %p393, %s24, 1
      %s395 = smul.addr %s394, 2
      %s396 = smul.addr %s395, 8
      %s397 = scalar_lea.vmem %s0, %s396
      %p398 = pneg %p45
      %p399 = pneg %p42
      %p400 = pneg %p66
      %p401 = pneg %p63
      %p402 = pneg %p87
      %p403 = pneg %p84
      %p404 = pneg %p108
      %p405 = pneg %p105
      %p406 = pneg %p129
      %p407 = pneg %p126
      %p408 = pneg %p150
      %p409 = pneg %p147
      %p410 = pneg %p171
      %p411 = pneg %p168
      %p412 = pneg %p192
      %p413 = pneg %p189
      %p414 = pneg %p213
      %p415 = pneg %p210
      %p416 = pneg %p234
      %p417 = pneg %p231
      %p418 = pneg %p255
      %p419 = pneg %p252
      %p420 = pneg %p276
      %p421 = pneg %p273
      %p422 = pneg %p297
      %p423 = pneg %p294
      %p424 = pneg %p323
      %p425 = pneg %p320
      %p426 = scmp.lt.s32.totalorder %s24, 1
      %s427 = scalar_select %p426, %s24, 1
      %s428 = smul.addr %s427, 2
      %s429 = smul.addr %s428, 8
      %s430 = scalar_lea.vmem %s13, %s429
      %p431 = scmp.lt.s32.totalorder %s24, 1
      %s432 = scalar_select %p431, %s24, 1
      %s433 = smul.addr %s432, 2
      %s434 = smul.addr %s433, 8
      %s435 = scalar_lea.vmem %s0, %s434
      %p436 = scmp.lt.s32.totalorder %s24, 1
      %s437 = scalar_select %p436, %s24, 1
      %s438 = smul.addr %s437, 2
      %s439 = smul.addr %s438, 8
      %s440 = scalar_lea.vmem %s13, %s439
      %v441 = vld [vmem:[%s435] sm:$0xff]
      %v442 = vld [vmem:[%s435 + $0x8] sm:$0xff]
      %v443 = vld [vmem:[%s1] sm:$0xff]
      %v444 = vld [vmem:[%s1 + $0x8] sm:$0xff]
      %v445 = vld [vmem:[%s1 + $0x10] sm:$0xff]
      %v446 = vld [vmem:[%s1 + $0x18] sm:$0xff]
      %vm447 = vcmask 64512
      %v449 = vsel %vm447, %v443, 0
      %v452 = vsel %vm447, %v444, 0
      %v455 = vsel %vm447, %v445, 0
      %v458 = vsel %vm447, %v446, 0
      %v460 = vand.u32 %v442, 4294901760
      %461 = vmatprep.subr.mxu0 %v460
      %v462 = vand.u32 %v441, 4294901760
      %463 = vmatpush1.msra.mxu0 %v462
      %464 = vmatprep.subr.mxu0 0.0
      %465 = vmatpush1.msra.mxu0 0.0
      %466 = vmatprep.subr.mxu0 0.0
      %467 = vmatpush1.msra.mxu0 0.0
      %468 = vmatprep.subr.mxu0 0.0
      %469 = vmatpush1.msra.mxu0 0.0
      %470 = vmatprep.subr.mxu0 0.0
      %471 = vmatpush1.msra.mxu0 0.0
      %472 = vmatprep.subr.mxu0 0.0
      %473 = vmatpush1.msra.mxu0 0.0
      %474 = vmatprep.subr.mxu0 0.0
      %475 = vmatpush1.msra.mxu0 0.0
      %476 = vmatprep.subr.mxu0 0.0
      %477 = vmatpush1.msra.mxu0 0.0
      %478 = vmatprep.subr.mxu0 0.0
      %479 = vmatpush1.msra.mxu0 0.0
      %480 = vmatprep.subr.mxu0 0.0
      %481 = vmatpush1.msra.mxu0 0.0
      %482 = vmatprep.subr.mxu0 0.0
      %483 = vmatpush1.msra.mxu0 0.0
      %484 = vmatprep.subr.mxu0 0.0
      %485 = vmatpush1.msra.mxu0 0.0
      %486 = vmatprep.subr.mxu0 0.0
      %487 = vmatpush1.msra.mxu0 0.0
      %488 = vmatprep.subr.mxu0 0.0
      %489 = vmatpush1.msra.mxu0 0.0
      %490 = vmatprep.subr.mxu0 0.0
      %491 = vmatpush1.msra.mxu0 0.0
      %492 = vmatprep.subr.mxu0 0.0
      %493 = vmatpush1.msra.mxu0 0.0
      %494 = vmatprep.subr.mxu0 0.0
      %495 = vmatpush1.msra.mxu0 0.0
      %496 = vmatprep.subr.mxu0 0.0
      %497 = vmatpush1.msra.mxu0 0.0
      %498 = vmatprep.subr.mxu0 0.0
      %499 = vmatpush1.msra.mxu0 0.0
      %500 = vmatprep.subr.mxu0 0.0
      %501 = vmatpush1.msra.mxu0 0.0
      %502 = vmatprep.subr.mxu0 0.0
      %503 = vmatpush1.msra.mxu0 0.0
      %504 = vmatprep.subr.mxu0 0.0
      %505 = vmatpush1.msra.mxu0 0.0
      %506 = vmatprep.subr.mxu0 0.0
      %507 = vmatpush1.msra.mxu0 0.0
      %508 = vmatprep.subr.mxu0 0.0
      %509 = vmatpush1.msra.mxu0 0.0
      %510 = vmatprep.subr.mxu0 0.0
      %511 = vmatpush1.msra.mxu0 0.0
      %512 = vmatprep.subr.mxu0 0.0
      %513 = vmatpush1.msra.mxu0 0.0
      %514 = vmatprep.subr.mxu0 0.0
      %515 = vmatpush1.msra.mxu0 0.0
      %516 = vmatprep.subr.mxu0 0.0
      %517 = vmatpush1.msra.mxu0 0.0
      %518 = vmatprep.subr.mxu0 0.0
      %519 = vmatpush1.msra.mxu0 0.0
      %520 = vmatprep.subr.mxu0 0.0
      %521 = vmatpush1.msra.mxu0 0.0
      %522 = vmatprep.subr.mxu0 0.0
      %523 = vmatpush1.msra.mxu0 0.0
      %524 = vmatprep.subr.mxu0 0.0
      %525 = vmatpush1.msra.mxu0 0.0
      %526 = vmatprep.mubr.f32.mxu0 0.0
      %v527 = vand.u32 %v449, 4294901760
      %v528 = vsub.f32 %v449, %v527
      %v529 = vand.u32 %v528, 4294901760
      %v530 = vsub.f32 %v528, %v529
      %v531 = vand.u32 %v530, 4294901760
      %532 = vmatmul.mubr.f32.gmra.mrb[0].mxu0 %v531
      %v533 = vpop.f32.mrb[0].mxu0
      %v534 = vadd.f32 0.0, %v533
      %v535 = vpop.f32.mrb[0].mxu0
      %v536 = vadd.f32 0.0, %v535
      %537 = vmatprep.mubr.f32.mxu0 0.0
      %v538 = vand.u32 %v452, 4294901760
      %v539 = vsub.f32 %v452, %v538
      %v540 = vand.u32 %v539, 4294901760
      %v541 = vsub.f32 %v539, %v540
      %v542 = vand.u32 %v541, 4294901760
      %543 = vmatmul.mubr.f32.gmra.mrb[0].mxu0 %v542
      %v544 = vpop.f32.mrb[0].mxu0
      %v545 = vadd.f32 0.0, %v544
      %v546 = vpop.f32.mrb[0].mxu0
      %v547 = vadd.f32 0.0, %v546
      %548 = vmatprep.mubr.f32.mxu0 0.0
      %v549 = vand.u32 %v455, 4294901760
      %v550 = vsub.f32 %v455, %v549
      %v551 = vand.u32 %v550, 4294901760
      %v552 = vsub.f32 %v550, %v551
      %v553 = vand.u32 %v552, 4294901760
      %554 = vmatmul.mubr.f32.gmra.mrb[0].mxu0 %v553
      %v555 = vpop.f32.mrb[0].mxu0
      %v556 = vadd.f32 0.0, %v555
      %v557 = vpop.f32.mrb[0].mxu0
      %v558 = vadd.f32 0.0, %v557
      %559 = vmatprep.mubr.f32.mxu0 0.0
      %v560 = vand.u32 %v458, 4294901760
      %v561 = vsub.f32 %v458, %v560
      %v562 = vand.u32 %v561, 4294901760
      %v563 = vsub.f32 %v561, %v562
      %v564 = vand.u32 %v563, 4294901760
      %565 = vmatmul.mubr.f32.gmra.mrb[0].mxu0 %v564
      %v566 = vpop.f32.mrb[0].mxu0
      %v567 = vadd.f32 0.0, %v566
      %v568 = vpop.f32.mrb[0].mxu0
      %v569 = vadd.f32 0.0, %v568
      %570 = vdwg.mxu0
      %v571 = vand.u32 %v442, 4294901760
      %v572 = vsub.f32 %v442, %v571
      %v573 = vand.u32 %v572, 4294901760
      %v574 = vsub.f32 %v572, %v573
      %v575 = vand.u32 %v574, 4294901760
      %576 = vmatprep.subr.mxu0 %v575
      %v577 = vand.u32 %v441, 4294901760
      %v578 = vsub.f32 %v441, %v577
      %v579 = vand.u32 %v578, 4294901760
      %v580 = vsub.f32 %v578, %v579
      %v581 = vand.u32 %v580, 4294901760
      %582 = vmatpush1.msra.mxu0 %v581
      %583 = vmatprep.subr.mxu0 0.0
      %584 = vmatpush1.msra.mxu0 0.0
      %585 = vmatprep.subr.mxu0 0.0
      %586 = vmatpush1.msra.mxu0 0.0
      %587 = vmatprep.subr.mxu0 0.0
      %588 = vmatpush1.msra.mxu0 0.0
      %589 = vmatprep.subr.mxu0 0.0
      %590 = vmatpush1.msra.mxu0 0.0
      %591 = vmatprep.subr.mxu0 0.0
      %592 = vmatpush1.msra.mxu0 0.0
      %593 = vmatprep.subr.mxu0 0.0
      %594 = vmatpush1.msra.mxu0 0.0
      %595 = vmatprep.subr.mxu0 0.0
      %596 = vmatpush1.msra.mxu0 0.0
      %597 = vmatprep.subr.mxu0 0.0
      %598 = vmatpush1.msra.mxu0 0.0
      %599 = vmatprep.subr.mxu0 0.0
      %600 = vmatpush1.msra.mxu0 0.0
      %601 = vmatprep.subr.mxu0 0.0
      %602 = vmatpush1.msra.mxu0 0.0
      %603 = vmatprep.subr.mxu0 0.0
      %604 = vmatpush1.msra.mxu0 0.0
      %605 = vmatprep.subr.mxu0 0.0
      %606 = vmatpush1.msra.mxu0 0.0
      %607 = vmatprep.subr.mxu0 0.0
      %608 = vmatpush1.msra.mxu0 0.0
      %609 = vmatprep.subr.mxu0 0.0
      %610 = vmatpush1.msra.mxu0 0.0
      %611 = vmatprep.subr.mxu0 0.0
      %612 = vmatpush1.msra.mxu0 0.0
      %613 = vmatprep.subr.mxu0 0.0
      %614 = vmatpush1.msra.mxu0 0.0
      %615 = vmatprep.subr.mxu0 0.0
      %616 = vmatpush1.msra.mxu0 0.0
      %617 = vmatprep.subr.mxu0 0.0
      %618 = vmatpush1.msra.mxu0 0.0
      %619 = vmatprep.subr.mxu0 0.0
      %620 = vmatpush1.msra.mxu0 0.0
      %621 = vmatprep.subr.mxu0 0.0
      %622 = vmatpush1.msra.mxu0 0.0
      %623 = vmatprep.subr.mxu0 0.0
      %624 = vmatpush1.msra.mxu0 0.0
      %625 = vmatprep.subr.mxu0 0.0
      %626 = vmatpush1.msra.mxu0 0.0
      %627 = vmatprep.subr.mxu0 0.0
      %628 = vmatpush1.msra.mxu0 0.0
      %629 = vmatprep.subr.mxu0 0.0
      %630 = vmatpush1.msra.mxu0 0.0
      %631 = vmatprep.subr.mxu0 0.0
      %632 = vmatpush1.msra.mxu0 0.0
      %633 = vmatprep.subr.mxu0 0.0
      %634 = vmatpush1.msra.mxu0 0.0
      %635 = vmatprep.subr.mxu0 0.0
      %636 = vmatpush1.msra.mxu0 0.0
      %637 = vmatprep.subr.mxu0 0.0
      %638 = vmatpush1.msra.mxu0 0.0
      %639 = vmatprep.subr.mxu0 0.0
      %640 = vmatpush1.msra.mxu0 0.0
      %641 = vmatprep.subr.mxu0 0.0
      %642 = vmatpush1.msra.mxu0 0.0
      %643 = vmatprep.subr.mxu0 0.0
      %644 = vmatpush1.msra.mxu0 0.0
      %645 = vmatprep.mubr.f32.mxu0 0.0
      %v646 = vand.u32 %v449, 4294901760
      %647 = vmatmul.mubr.f32.gmra.mrb[0].mxu0 %v646
      %v648 = vpop.f32.mrb[0].mxu0
      %v649 = vadd.f32 %v534, %v648
      %v650 = vpop.f32.mrb[0].mxu0
      %v651 = vadd.f32 %v536, %v650
      %652 = vmatprep.mubr.f32.mxu0 0.0
      %v653 = vand.u32 %v452, 4294901760
      %654 = vmatmul.mubr.f32.gmra.mrb[0].mxu0 %v653
      %v655 = vpop.f32.mrb[0].mxu0
      %v656 = vadd.f32 %v545, %v655
      %v657 = vpop.f32.mrb[0].mxu0
      %v658 = vadd.f32 %v547, %v657
      %659 = vmatprep.mubr.f32.mxu0 0.0
      %v660 = vand.u32 %v455, 4294901760
      %661 = vmatmul.mubr.f32.gmra.mrb[0].mxu0 %v660
      %v662 = vpop.f32.mrb[0].mxu0
      %v663 = vadd.f32 %v556, %v662
      %v664 = vpop.f32.mrb[0].mxu0
      %v665 = vadd.f32 %v558, %v664
      %666 = vmatprep.mubr.f32.mxu0 0.0
      %v667 = vand.u32 %v458, 4294901760
      %668 = vmatmul.mubr.f32.gmra.mrb[0].mxu0 %v667
      %v669 = vpop.f32.mrb[0].mxu0
      %v670 = vadd.f32 %v567, %v669
      %v671 = vpop.f32.mrb[0].mxu0
      %v672 = vadd.f32 %v569, %v671
      %673 = vdwg.mxu0
      %v674 = vand.u32 %v442, 4294901760
      %v675 = vsub.f32 %v442, %v674
      %676 = vmatprep.subr.mxu0 %v675
      %v677 = vand.u32 %v441, 4294901760
      %v678 = vsub.f32 %v441, %v677
      %679 = vmatpush1.msra.mxu0 %v678
      %680 = vmatprep.subr.mxu0 0.0
      %681 = vmatpush1.msra.mxu0 0.0
      %682 = vmatprep.subr.mxu0 0.0
      %683 = vmatpush1.msra.mxu0 0.0
      %684 = vmatprep.subr.mxu0 0.0
      %685 = vmatpush1.msra.mxu0 0.0
      %686 = vmatprep.subr.mxu0 0.0
      %687 = vmatpush1.msra.mxu0 0.0
      %688 = vmatprep.subr.mxu0 0.0
      %689 = vmatpush1.msra.mxu0 0.0
      %690 = vmatprep.subr.mxu0 0.0
      %691 = vmatpush1.msra.mxu0 0.0
      %692 = vmatprep.subr.mxu0 0.0
      %693 = vmatpush1.msra.mxu0 0.0
      %694 = vmatprep.subr.mxu0 0.0
      %695 = vmatpush1.msra.mxu0 0.0
      %696 = vmatprep.subr.mxu0 0.0
      %697 = vmatpush1.msra.mxu0 0.0
      %698 = vmatprep.subr.mxu0 0.0
      %699 = vmatpush1.msra.mxu0 0.0
      %700 = vmatprep.subr.mxu0 0.0
      %701 = vmatpush1.msra.mxu0 0.0
      %702 = vmatprep.subr.mxu0 0.0
      %703 = vmatpush1.msra.mxu0 0.0
      %704 = vmatprep.subr.mxu0 0.0
      %705 = vmatpush1.msra.mxu0 0.0
      %706 = vmatprep.subr.mxu0 0.0
      %707 = vmatpush1.msra.mxu0 0.0
      %708 = vmatprep.subr.mxu0 0.0
      %709 = vmatpush1.msra.mxu0 0.0
      %710 = vmatprep.subr.mxu0 0.0
      %711 = vmatpush1.msra.mxu0 0.0
      %712 = vmatprep.subr.mxu0 0.0
      %713 = vmatpush1.msra.mxu0 0.0
      %714 = vmatprep.subr.mxu0 0.0
      %715 = vmatpush1.msra.mxu0 0.0
      %716 = vmatprep.subr.mxu0 0.0
      %717 = vmatpush1.msra.mxu0 0.0
      %718 = vmatprep.subr.mxu0 0.0
      %719 = vmatpush1.msra.mxu0 0.0
      %720 = vmatprep.subr.mxu0 0.0
      %721 = vmatpush1.msra.mxu0 0.0
      %722 = vmatprep.subr.mxu0 0.0
      %723 = vmatpush1.msra.mxu0 0.0
      %724 = vmatprep.subr.mxu0 0.0
      %725 = vmatpush1.msra.mxu0 0.0
      %726 = vmatprep.subr.mxu0 0.0
      %727 = vmatpush1.msra.mxu0 0.0
      %728 = vmatprep.subr.mxu0 0.0
      %729 = vmatpush1.msra.mxu0 0.0
      %730 = vmatprep.subr.mxu0 0.0
      %731 = vmatpush1.msra.mxu0 0.0
      %732 = vmatprep.subr.mxu0 0.0
      %733 = vmatpush1.msra.mxu0 0.0
      %734 = vmatprep.subr.mxu0 0.0
      %735 = vmatpush1.msra.mxu0 0.0
      %736 = vmatprep.subr.mxu0 0.0
      %737 = vmatpush1.msra.mxu0 0.0
      %738 = vmatprep.subr.mxu0 0.0
      %739 = vmatpush1.msra.mxu0 0.0
      %740 = vmatprep.subr.mxu0 0.0
      %741 = vmatpush1.msra.mxu0 0.0
      %742 = vmatprep.mubr.f32.mxu0 0.0
      %v743 = vand.u32 %v449, 4294901760
      %v744 = vsub.f32 %v449, %v743
      %745 = vmatmul.mubr.f32.gmra.mrb[0].mxu0 %v744
      %v746 = vpop.f32.mrb[0].mxu0
      %v747 = vadd.f32 %v649, %v746
      %v748 = vpop.f32.mrb[0].mxu0
      %v749 = vadd.f32 %v651, %v748
      %750 = vmatprep.mubr.f32.mxu0 0.0
      %v751 = vand.u32 %v452, 4294901760
      %v752 = vsub.f32 %v452, %v751
      %753 = vmatmul.mubr.f32.gmra.mrb[0].mxu0 %v752
      %v754 = vpop.f32.mrb[0].mxu0
      %v755 = vadd.f32 %v656, %v754
      %v756 = vpop.f32.mrb[0].mxu0
      %v757 = vadd.f32 %v658, %v756
      %758 = vmatprep.mubr.f32.mxu0 0.0
      %v759 = vand.u32 %v455, 4294901760
      %v760 = vsub.f32 %v455, %v759
      %761 = vmatmul.mubr.f32.gmra.mrb[0].mxu0 %v760
      %v762 = vpop.f32.mrb[0].mxu0
      %v763 = vadd.f32 %v663, %v762
      %v764 = vpop.f32.mrb[0].mxu0
      %v765 = vadd.f32 %v665, %v764
      %766 = vmatprep.mubr.f32.mxu0 0.0
      %v767 = vand.u32 %v458, 4294901760
      %v768 = vsub.f32 %v458, %v767
      %769 = vmatmul.mubr.f32.gmra.mrb[0].mxu0 %v768
      %v770 = vpop.f32.mrb[0].mxu0
      %v771 = vadd.f32 %v670, %v770
      %v772 = vpop.f32.mrb[0].mxu0
      %v773 = vadd.f32 %v672, %v772
      %774 = vdwg.mxu0
      %v775 = vand.u32 %v442, 4294901760
      %776 = vmatprep.subr.mxu0 %v775
      %v777 = vand.u32 %v441, 4294901760
      %778 = vmatpush1.msra.mxu0 %v777
      %779 = vmatprep.subr.mxu0 0.0
      %780 = vmatpush1.msra.mxu0 0.0
      %781 = vmatprep.subr.mxu0 0.0
      %782 = vmatpush1.msra.mxu0 0.0
      %783 = vmatprep.subr.mxu0 0.0
      %784 = vmatpush1.msra.mxu0 0.0
      %785 = vmatprep.subr.mxu0 0.0
      %786 = vmatpush1.msra.mxu0 0.0
      %787 = vmatprep.subr.mxu0 0.0
      %788 = vmatpush1.msra.mxu0 0.0
      %789 = vmatprep.subr.mxu0 0.0
      %790 = vmatpush1.msra.mxu0 0.0
      %791 = vmatprep.subr.mxu0 0.0
      %792 = vmatpush1.msra.mxu0 0.0
      %793 = vmatprep.subr.mxu0 0.0
      %794 = vmatpush1.msra.mxu0 0.0
      %795 = vmatprep.subr.mxu0 0.0
      %796 = vmatpush1.msra.mxu0 0.0
      %797 = vmatprep.subr.mxu0 0.0
      %798 = vmatpush1.msra.mxu0 0.0
      %799 = vmatprep.subr.mxu0 0.0
      %800 = vmatpush1.msra.mxu0 0.0
      %801 = vmatprep.subr.mxu0 0.0
      %802 = vmatpush1.msra.mxu0 0.0
      %803 = vmatprep.subr.mxu0 0.0
      %804 = vmatpush1.msra.mxu0 0.0
      %805 = vmatprep.subr.mxu0 0.0
      %806 = vmatpush1.msra.mxu0 0.0
      %807 = vmatprep.subr.mxu0 0.0
      %808 = vmatpush1.msra.mxu0 0.0
      %809 = vmatprep.subr.mxu0 0.0
      %810 = vmatpush1.msra.mxu0 0.0
      %811 = vmatprep.subr.mxu0 0.0
      %812 = vmatpush1.msra.mxu0 0.0
      %813 = vmatprep.subr.mxu0 0.0
      %814 = vmatpush1.msra.mxu0 0.0
      %815 = vmatprep.subr.mxu0 0.0
      %816 = vmatpush1.msra.mxu0 0.0
      %817 = vmatprep.subr.mxu0 0.0
      %818 = vmatpush1.msra.mxu0 0.0
      %819 = vmatprep.subr.mxu0 0.0
      %820 = vmatpush1.msra.mxu0 0.0
      %821 = vmatprep.subr.mxu0 0.0
      %822 = vmatpush1.msra.mxu0 0.0
      %823 = vmatprep.subr.mxu0 0.0
      %824 = vmatpush1.msra.mxu0 0.0
      %825 = vmatprep.subr.mxu0 0.0
      %826 = vmatpush1.msra.mxu0 0.0
      %827 = vmatprep.subr.mxu0 0.0
      %828 = vmatpush1.msra.mxu0 0.0
      %829 = vmatprep.subr.mxu0 0.0
      %830 = vmatpush1.msra.mxu0 0.0
      %831 = vmatprep.subr.mxu0 0.0
      %832 = vmatpush1.msra.mxu0 0.0
      %833 = vmatprep.subr.mxu0 0.0
      %834 = vmatpush1.msra.mxu0 0.0
      %835 = vmatprep.subr.mxu0 0.0
      %836 = vmatpush1.msra.mxu0 0.0
      %837 = vmatprep.subr.mxu0 0.0
      %838 = vmatpush1.msra.mxu0 0.0
      %839 = vmatprep.subr.mxu0 0.0
      %840 = vmatpush1.msra.mxu0 0.0
      %841 = vmatprep.mubr.f32.mxu0 0.0
      %v842 = vand.u32 %v449, 4294901760
      %v843 = vsub.f32 %v449, %v842
      %v844 = vand.u32 %v843, 4294901760
      %845 = vmatmul.mubr.f32.gmra.mrb[0].mxu0 %v844
      %v846 = vpop.f32.mrb[0].mxu0
      %v847 = vadd.f32 %v747, %v846
      %v848 = vpop.f32.mrb[0].mxu0
      %v849 = vadd.f32 %v749, %v848
      %850 = vmatprep.mubr.f32.mxu0 0.0
      %v851 = vand.u32 %v452, 4294901760
      %v852 = vsub.f32 %v452, %v851
      %v853 = vand.u32 %v852, 4294901760
      %854 = vmatmul.mubr.f32.gmra.mrb[0].mxu0 %v853
      %v855 = vpop.f32.mrb[0].mxu0
      %v856 = vadd.f32 %v755, %v855
      %v857 = vpop.f32.mrb[0].mxu0
      %v858 = vadd.f32 %v757, %v857
      %859 = vmatprep.mubr.f32.mxu0 0.0
      %v860 = vand.u32 %v455, 4294901760
      %v861 = vsub.f32 %v455, %v860
      %v862 = vand.u32 %v861, 4294901760
      %863 = vmatmul.mubr.f32.gmra.mrb[0].mxu0 %v862
      %v864 = vpop.f32.mrb[0].mxu0
      %v865 = vadd.f32 %v763, %v864
      %v866 = vpop.f32.mrb[0].mxu0
      %v867 = vadd.f32 %v765, %v866
      %868 = vmatprep.mubr.f32.mxu0 0.0
      %v869 = vand.u32 %v458, 4294901760
      %v870 = vsub.f32 %v458, %v869
      %v871 = vand.u32 %v870, 4294901760
      %872 = vmatmul.mubr.f32.gmra.mrb[0].mxu0 %v871
      %v873 = vpop.f32.mrb[0].mxu0
      %v874 = vadd.f32 %v771, %v873
      %v875 = vpop.f32.mrb[0].mxu0
      %v876 = vadd.f32 %v773, %v875
      %877 = vdwg.mxu0
      %v878 = vand.u32 %v442, 4294901760
      %v879 = vsub.f32 %v442, %v878
      %v880 = vand.u32 %v879, 4294901760
      %881 = vmatprep.subr.mxu0 %v880
      %v882 = vand.u32 %v441, 4294901760
      %v883 = vsub.f32 %v441, %v882
      %v884 = vand.u32 %v883, 4294901760
      %885 = vmatpush1.msra.mxu0 %v884
      %886 = vmatprep.subr.mxu0 0.0
      %887 = vmatpush1.msra.mxu0 0.0
      %888 = vmatprep.subr.mxu0 0.0
      %889 = vmatpush1.msra.mxu0 0.0
      %890 = vmatprep.subr.mxu0 0.0
      %891 = vmatpush1.msra.mxu0 0.0
      %892 = vmatprep.subr.mxu0 0.0
      %893 = vmatpush1.msra.mxu0 0.0
      %894 = vmatprep.subr.mxu0 0.0
      %895 = vmatpush1.msra.mxu0 0.0
      %896 = vmatprep.subr.mxu0 0.0
      %897 = vmatpush1.msra.mxu0 0.0
      %898 = vmatprep.subr.mxu0 0.0
      %899 = vmatpush1.msra.mxu0 0.0
      %900 = vmatprep.subr.mxu0 0.0
      %901 = vmatpush1.msra.mxu0 0.0
      %902 = vmatprep.subr.mxu0 0.0
      %903 = vmatpush1.msra.mxu0 0.0
      %904 = vmatprep.subr.mxu0 0.0
      %905 = vmatpush1.msra.mxu0 0.0
      %906 = vmatprep.subr.mxu0 0.0
      %907 = vmatpush1.msra.mxu0 0.0
      %908 = vmatprep.subr.mxu0 0.0
      %909 = vmatpush1.msra.mxu0 0.0
      %910 = vmatprep.subr.mxu0 0.0
      %911 = vmatpush1.msra.mxu0 0.0
      %912 = vmatprep.subr.mxu0 0.0
      %913 = vmatpush1.msra.mxu0 0.0
      %914 = vmatprep.subr.mxu0 0.0
      %915 = vmatpush1.msra.mxu0 0.0
      %916 = vmatprep.subr.mxu0 0.0
      %917 = vmatpush1.msra.mxu0 0.0
      %918 = vmatprep.subr.mxu0 0.0
      %919 = vmatpush1.msra.mxu0 0.0
      %920 = vmatprep.subr.mxu0 0.0
      %921 = vmatpush1.msra.mxu0 0.0
      %922 = vmatprep.subr.mxu0 0.0
      %923 = vmatpush1.msra.mxu0 0.0
      %924 = vmatprep.subr.mxu0 0.0
      %925 = vmatpush1.msra.mxu0 0.0
      %926 = vmatprep.subr.mxu0 0.0
      %927 = vmatpush1.msra.mxu0 0.0
      %928 = vmatprep.subr.mxu0 0.0
      %929 = vmatpush1.msra.mxu0 0.0
      %930 = vmatprep.subr.mxu0 0.0
      %931 = vmatpush1.msra.mxu0 0.0
      %932 = vmatprep.subr.mxu0 0.0
      %933 = vmatpush1.msra.mxu0 0.0
      %934 = vmatprep.subr.mxu0 0.0
      %935 = vmatpush1.msra.mxu0 0.0
      %936 = vmatprep.subr.mxu0 0.0
      %937 = vmatpush1.msra.mxu0 0.0
      %938 = vmatprep.subr.mxu0 0.0
      %939 = vmatpush1.msra.mxu0 0.0
      %940 = vmatprep.subr.mxu0 0.0
      %941 = vmatpush1.msra.mxu0 0.0
      %942 = vmatprep.subr.mxu0 0.0
      %943 = vmatpush1.msra.mxu0 0.0
      %944 = vmatprep.subr.mxu0 0.0
      %945 = vmatpush1.msra.mxu0 0.0
      %946 = vmatprep.subr.mxu0 0.0
      %947 = vmatpush1.msra.mxu0 0.0
      %948 = vmatprep.mubr.f32.mxu0 0.0
      %v949 = vand.u32 %v449, 4294901760
      %950 = vmatmul.mubr.f32.gmra.mrb[0].mxu0 %v949
      %v951 = vpop.f32.mrb[0].mxu0
      %v952 = vadd.f32 %v847, %v951
      %v953 = vpop.f32.mrb[0].mxu0
      %v954 = vadd.f32 %v849, %v953
      %955 = vmatprep.mubr.f32.mxu0 0.0
      %v956 = vand.u32 %v452, 4294901760
      %957 = vmatmul.mubr.f32.gmra.mrb[0].mxu0 %v956
      %v958 = vpop.f32.mrb[0].mxu0
      %v959 = vadd.f32 %v856, %v958
      %v960 = vpop.f32.mrb[0].mxu0
      %v961 = vadd.f32 %v858, %v960
      %962 = vmatprep.mubr.f32.mxu0 0.0
      %v963 = vand.u32 %v455, 4294901760
      %964 = vmatmul.mubr.f32.gmra.mrb[0].mxu0 %v963
      %v965 = vpop.f32.mrb[0].mxu0
      %v966 = vadd.f32 %v865, %v965
      %v967 = vpop.f32.mrb[0].mxu0
      %v968 = vadd.f32 %v867, %v967
      %969 = vmatprep.mubr.f32.mxu0 0.0
      %v970 = vand.u32 %v458, 4294901760
      %971 = vmatmul.mubr.f32.gmra.mrb[0].mxu0 %v970
      %v972 = vpop.f32.mrb[0].mxu0
      %v973 = vadd.f32 %v874, %v972
      %v974 = vpop.f32.mrb[0].mxu0
      %v975 = vadd.f32 %v876, %v974
      %976 = vdwg.mxu0
      %v977 = vand.u32 %v442, 4294901760
      %978 = vmatprep.subr.mxu0 %v977
      %v979 = vand.u32 %v441, 4294901760
      %980 = vmatpush1.msra.mxu0 %v979
      %981 = vmatprep.subr.mxu0 0.0
      %982 = vmatpush1.msra.mxu0 0.0
      %983 = vmatprep.subr.mxu0 0.0
      %984 = vmatpush1.msra.mxu0 0.0
      %985 = vmatprep.subr.mxu0 0.0
      %986 = vmatpush1.msra.mxu0 0.0
      %987 = vmatprep.subr.mxu0 0.0
      %988 = vmatpush1.msra.mxu0 0.0
      %989 = vmatprep.subr.mxu0 0.0
      %990 = vmatpush1.msra.mxu0 0.0
      %991 = vmatprep.subr.mxu0 0.0
      %992 = vmatpush1.msra.mxu0 0.0
      %993 = vmatprep.subr.mxu0 0.0
      %994 = vmatpush1.msra.mxu0 0.0
      %995 = vmatprep.subr.mxu0 0.0
      %996 = vmatpush1.msra.mxu0 0.0
      %997 = vmatprep.subr.mxu0 0.0
      %998 = vmatpush1.msra.mxu0 0.0
      %999 = vmatprep.subr.mxu0 0.0
      %1000 = vmatpush1.msra.mxu0 0.0
      %1001 = vmatprep.subr.mxu0 0.0
      %1002 = vmatpush1.msra.mxu0 0.0
      %1003 = vmatprep.subr.mxu0 0.0
      %1004 = vmatpush1.msra.mxu0 0.0
      %1005 = vmatprep.subr.mxu0 0.0
      %1006 = vmatpush1.msra.mxu0 0.0
      %1007 = vmatprep.subr.mxu0 0.0
      %1008 = vmatpush1.msra.mxu0 0.0
      %1009 = vmatprep.subr.mxu0 0.0
      %1010 = vmatpush1.msra.mxu0 0.0
      %1011 = vmatprep.subr.mxu0 0.0
      %1012 = vmatpush1.msra.mxu0 0.0
      %1013 = vmatprep.subr.mxu0 0.0
      %1014 = vmatpush1.msra.mxu0 0.0
      %1015 = vmatprep.subr.mxu0 0.0
      %1016 = vmatpush1.msra.mxu0 0.0
      %1017 = vmatprep.subr.mxu0 0.0
      %1018 = vmatpush1.msra.mxu0 0.0
      %1019 = vmatprep.subr.mxu0 0.0
      %1020 = vmatpush1.msra.mxu0 0.0
      %1021 = vmatprep.subr.mxu0 0.0
      %1022 = vmatpush1.msra.mxu0 0.0
      %1023 = vmatprep.subr.mxu0 0.0
      %1024 = vmatpush1.msra.mxu0 0.0
      %1025 = vmatprep.subr.mxu0 0.0
      %1026 = vmatpush1.msra.mxu0 0.0
      %1027 = vmatprep.subr.mxu0 0.0
      %1028 = vmatpush1.msra.mxu0 0.0
      %1029 = vmatprep.subr.mxu0 0.0
      %1030 = vmatpush1.msra.mxu0 0.0
      %1031 = vmatprep.subr.mxu0 0.0
      %1032 = vmatpush1.msra.mxu0 0.0
      %1033 = vmatprep.subr.mxu0 0.0
      %1034 = vmatpush1.msra.mxu0 0.0
      %1035 = vmatprep.subr.mxu0 0.0
      %1036 = vmatpush1.msra.mxu0 0.0
      %1037 = vmatprep.subr.mxu0 0.0
      %1038 = vmatpush1.msra.mxu0 0.0
      %1039 = vmatprep.subr.mxu0 0.0
      %1040 = vmatpush1.msra.mxu0 0.0
      %1041 = vmatprep.subr.mxu0 0.0
      %1042 = vmatpush1.msra.mxu0 0.0
      %1043 = vmatprep.mubr.f32.mxu0 0.0
      %v1044 = vand.u32 %v449, 4294901760
      %1045 = vmatmul.mubr.f32.gmra.mrb[0].mxu0 %v1044
      %v1046 = vpop.f32.mrb[0].mxu0
      %v1047 = vadd.f32 %v952, %v1046
      %v1048 = vpop.f32.mrb[0].mxu0
      %v1049 = vadd.f32 %v954, %v1048
      %1050 = vmatprep.mubr.f32.mxu0 0.0
      %v1051 = vand.u32 %v452, 4294901760
      %1052 = vmatmul.mubr.f32.gmra.mrb[0].mxu0 %v1051
      %v1053 = vpop.f32.mrb[0].mxu0
      %v1054 = vadd.f32 %v959, %v1053
      %v1055 = vpop.f32.mrb[0].mxu0
      %v1056 = vadd.f32 %v961, %v1055
      %1057 = vmatprep.mubr.f32.mxu0 0.0
      %v1058 = vand.u32 %v455, 4294901760
      %1059 = vmatmul.mubr.f32.gmra.mrb[0].mxu0 %v1058
      %v1060 = vpop.f32.mrb[0].mxu0
      %v1061 = vadd.f32 %v966, %v1060
      %v1062 = vpop.f32.mrb[0].mxu0
      %v1063 = vadd.f32 %v968, %v1062
      %1064 = vmatprep.mubr.f32.mxu0 0.0
      %v1065 = vand.u32 %v458, 4294901760
      %1066 = vmatmul.mubr.f32.gmra.mrb[0].mxu0 %v1065
      %v1067 = vpop.f32.mrb[0].mxu0
      %v1068 = vadd.f32 %v973, %v1067
      %v1069 = vpop.f32.mrb[0].mxu0
      %v1070 = vadd.f32 %v975, %v1069
      %1071 = vdwg.mxu0
      %v1072 = vld [vmem:[%s2] sm:$0xff]
      %v1073 = vld [vmem:[%s2 + $0x8] sm:$0xff]
      %v1074 = vld [vmem:[%s2 + $0x10] sm:$0xff]
      %v1075 = vld [vmem:[%s2 + $0x18] sm:$0xff]
      %1077 = vset.pattern.permute.xlu0 0
      %1078 = vperm.xlu0 %1077, %v1072
      %v1079 = vpop.permute.xlu0 %1078
      %1082 = vset.pattern.permute.xlu0 0
      %1083 = vperm.xlu0 %1082, %v1073
      %v1084 = vpop.permute.xlu0 %1083
      %1087 = vset.pattern.permute.xlu0 0
      %1088 = vperm.xlu0 %1087, %v1074
      %v1089 = vpop.permute.xlu0 %1088
      %1092 = vset.pattern.permute.xlu0 0
      %1093 = vperm.xlu0 %1092, %v1075
      %v1094 = vpop.permute.xlu0 %1093
      %v1096 = vmul.f32 %v1047, %v1079
      %v1097 = vmul.f32 %v1049, %v1079
      %v1098 = vmul.f32 %v1054, %v1084
      %v1099 = vmul.f32 %v1056, %v1084
      %v1100 = vmul.f32 %v1061, %v1089
      %v1101 = vmul.f32 %v1063, %v1089
      %v1102 = vmul.f32 %v1068, %v1094
      %v1103 = vmul.f32 %v1070, %v1094
      %1104 = vset.pattern.permute.xlu0 1
      %1105 = vperm.xlu0 %1104, %v1072
      %v1106 = vpop.permute.xlu0 %1105
      %1108 = vset.pattern.permute.xlu0 1
      %1109 = vperm.xlu0 %1108, %v1073
      %v1110 = vpop.permute.xlu0 %1109
      %1112 = vset.pattern.permute.xlu0 1
      %1113 = vperm.xlu0 %1112, %v1074
      %v1114 = vpop.permute.xlu0 %1113
      %1116 = vset.pattern.permute.xlu0 1
      %1117 = vperm.xlu0 %1116, %v1075
      %v1118 = vpop.permute.xlu0 %1117
      %v1120 = vadd.f32 %v1096, %v1106
      %v1121 = vadd.f32 %v1097, %v1106
      %v1122 = vadd.f32 %v1098, %v1110
      %v1123 = vadd.f32 %v1099, %v1110
      %v1124 = vadd.f32 %v1100, %v1114
      %v1125 = vadd.f32 %v1101, %v1114
      %v1126 = vadd.f32 %v1102, %v1118
      %v1127 = vadd.f32 %v1103, %v1118
      %v1128 = vxor.u32 %v1120, 2147483648
      %v1129 = vxor.u32 %v1121, 2147483648
      %v1130 = vxor.u32 %v1122, 2147483648
      %v1131 = vxor.u32 %v1123, 2147483648
      %v1132 = vxor.u32 %v1124, 2147483648
      %v1133 = vxor.u32 %v1125, 2147483648
      %v1134 = vxor.u32 %v1126, 2147483648
      %v1135 = vxor.u32 %v1127, 2147483648
      %v1136 = vmul.f32 %v1128, 1.442695
      %v1137 = vpow.pop %v1136
      %v1138 = vmul.f32 %v1129, 1.442695
      %v1139 = vpow.pop %v1138
      %v1140 = vmul.f32 %v1130, 1.442695
      %v1141 = vpow.pop %v1140
      %v1142 = vmul.f32 %v1131, 1.442695
      %v1143 = vpow.pop %v1142
      %v1144 = vmul.f32 %v1132, 1.442695
      %v1145 = vpow.pop %v1144
      %v1146 = vmul.f32 %v1133, 1.442695
      %v1147 = vpow.pop %v1146
      %v1148 = vmul.f32 %v1134, 1.442695
      %v1149 = vpow.pop %v1148
      %v1150 = vmul.f32 %v1135, 1.442695
      %v1151 = vpow.pop %v1150
      %v1152 = vadd.f32 %v1137, 1.0
      %v1153 = vadd.f32 %v1139, 1.0
      %v1154 = vadd.f32 %v1141, 1.0
      %v1155 = vadd.f32 %v1143, 1.0
      %v1156 = vadd.f32 %v1145, 1.0
      %v1157 = vadd.f32 %v1147, 1.0
      %v1158 = vadd.f32 %v1149, 1.0
      %v1159 = vadd.f32 %v1151, 1.0
      %v1160 = vrcp.pop %v1152
      %v1161 = vmul.f32 1.0, %v1160
      %v1162 = vrcp.pop %v1153
      %v1163 = vmul.f32 1.0, %v1162
      %v1164 = vrcp.pop %v1154
      %v1165 = vmul.f32 1.0, %v1164
      %v1166 = vrcp.pop %v1155
      %v1167 = vmul.f32 1.0, %v1166
      %v1168 = vrcp.pop %v1156
      %v1169 = vmul.f32 1.0, %v1168
      %v1170 = vrcp.pop %v1157
      %v1171 = vmul.f32 1.0, %v1170
      %v1172 = vrcp.pop %v1158
      %v1173 = vmul.f32 1.0, %v1172
      %v1174 = vrcp.pop %v1159
      %v1175 = vmul.f32 1.0, %v1174
      %v1176 = vmul.f32 %v1120, %v1161
      %v1177 = vmul.f32 %v1121, %v1163
      %v1178 = vmul.f32 %v1122, %v1165
      %v1179 = vmul.f32 %v1123, %v1167
      %v1180 = vmul.f32 %v1124, %v1169
      %v1181 = vmul.f32 %v1125, %v1171
      %v1182 = vmul.f32 %v1126, %v1173
      %v1183 = vmul.f32 %v1127, %v1175
      %1184 = vrot.lane.b32.xlu0 %v1176, 17
      %v1185 = vpop.permute.xlu0 %1184
      %1186 = vrot.lane.b32.xlu0 %v1178, 17
      %v1187 = vpop.permute.xlu0 %1186
      %1188 = vrot.lane.b32.xlu0 %v1180, 17
      %v1189 = vpop.permute.xlu0 %1188
      %1190 = vrot.lane.b32.xlu0 %v1182, 17
      %v1191 = vpop.permute.xlu0 %1190
      %1192 = vrot.lane.b32.xlu0 %v1177, 17
      %v1193 = vpop.permute.xlu0 %1192
      %1194 = vrot.lane.b32.xlu0 %v1179, 17
      %v1195 = vpop.permute.xlu0 %1194
      %1196 = vrot.lane.b32.xlu0 %v1181, 17
      %v1197 = vpop.permute.xlu0 %1196
      %1198 = vrot.lane.b32.xlu0 %v1183, 17
      %v1199 = vpop.permute.xlu0 %1198
      %v1200 = vlaneseq
      %v1201 = vand.u32 %v1200, 127
      %vm1202 = vcmp.lt.s32.totalorder %v1201, 17
      %v1203 = vsel %vm1202, %v1185, %v1193
      %v1204 = vsel %vm1202, %v1187, %v1195
      %v1205 = vsel %vm1202, %v1189, %v1197
      %v1206 = vsel %vm1202, %v1191, %v1199
      %v1207 = vsel %vm1202, %v1193, %v1185
      %v1208 = vsel %vm1202, %v1195, %v1187
      %v1209 = vsel %vm1202, %v1197, %v1189
      %v1210 = vsel %vm1202, %v1199, %v1191
      %v1211 = vld [vmem:[%s4] ss:$8 sm:$0x3]
      %v1213 = vlaneseq
      %v1214 = vshrl.u32 %v1213, 7
      %v1215 = vsub.s32 0, %v1214
      %v1216 = vrot.slane %v1211, %v1215
      %v1217 = vlaneseq
      %v1218 = vshrl.u32 %v1217, 7
      %v1219 = vsub.s32 1, %v1218
      %v1220 = vrot.slane %v1211, %v1219
      %v1223 = vmul.f32 %v1207, %v1216
      %v1224 = vmul.f32 %v1203, %v1220
      %v1225 = vmul.f32 %v1208, %v1216
      %v1226 = vmul.f32 %v1204, %v1220
      %v1227 = vmul.f32 %v1209, %v1216
      %v1228 = vmul.f32 %v1205, %v1220
      %v1229 = vmul.f32 %v1210, %v1216
      %v1230 = vmul.f32 %v1206, %v1220
      %v1231 = vld [vmem:[%s3] sm:$0xff]
      %v1232 = vld [vmem:[%s3 + $0x8] sm:$0xff]
      %v1233 = vld [vmem:[%s3 + $0x10] sm:$0xff]
      %v1234 = vld [vmem:[%s3 + $0x18] sm:$0xff]
      %1236 = vset.pattern.permute.xlu0 0
      %1237 = vperm.xlu0 %1236, %v1231
      %v1238 = vpop.permute.xlu0 %1237
      %1241 = vset.pattern.permute.xlu0 0
      %1242 = vperm.xlu0 %1241, %v1232
      %v1243 = vpop.permute.xlu0 %1242
      %1246 = vset.pattern.permute.xlu0 0
      %1247 = vperm.xlu0 %1246, %v1233
      %v1248 = vpop.permute.xlu0 %1247
      %1251 = vset.pattern.permute.xlu0 0
      %1252 = vperm.xlu0 %1251, %v1234
      %v1253 = vpop.permute.xlu0 %1252
      %v1255 = vmul.f32 %v1223, %v1238
      %v1256 = vmul.f32 %v1224, %v1238
      %v1257 = vmul.f32 %v1225, %v1243
      %v1258 = vmul.f32 %v1226, %v1243
      %v1259 = vmul.f32 %v1227, %v1248
      %v1260 = vmul.f32 %v1228, %v1248
      %v1261 = vmul.f32 %v1229, %v1253
      %v1262 = vmul.f32 %v1230, %v1253
      %v1263 = vadd.f32 %v1255, 0.0
      %v1264 = vadd.f32 %v1256, 0.0
      %v1265 = vadd.f32 %v1257, 0.0
      %v1266 = vadd.f32 %v1258, 0.0
      %v1267 = vadd.f32 %v1259, 0.0
      %v1268 = vadd.f32 %v1260, 0.0
      %v1269 = vadd.f32 %v1261, 0.0
      %v1270 = vadd.f32 %v1262, 0.0
      %1271 = vrot.lane.b32.xlu0 %v1176, 16
      %v1272 = vpop.permute.xlu0 %1271
      %1273 = vrot.lane.b32.xlu0 %v1178, 16
      %v1274 = vpop.permute.xlu0 %1273
      %1275 = vrot.lane.b32.xlu0 %v1180, 16
      %v1276 = vpop.permute.xlu0 %1275
      %1277 = vrot.lane.b32.xlu0 %v1182, 16
      %v1278 = vpop.permute.xlu0 %1277
      %1279 = vrot.lane.b32.xlu0 %v1177, 16
      %v1280 = vpop.permute.xlu0 %1279
      %1281 = vrot.lane.b32.xlu0 %v1179, 16
      %v1282 = vpop.permute.xlu0 %1281
      %1283 = vrot.lane.b32.xlu0 %v1181, 16
      %v1284 = vpop.permute.xlu0 %1283
      %1285 = vrot.lane.b32.xlu0 %v1183, 16
      %v1286 = vpop.permute.xlu0 %1285
      %vm1287 = vcmp.lt.s32.totalorder %v1201, 16
      %v1288 = vsel %vm1287, %v1272, %v1280
      %v1289 = vsel %vm1287, %v1274, %v1282
      %v1290 = vsel %vm1287, %v1276, %v1284
      %v1291 = vsel %vm1287, %v1278, %v1286
      %v1292 = vsel %vm1287, %v1280, %v1272
      %v1293 = vsel %vm1287, %v1282, %v1274
      %v1294 = vsel %vm1287, %v1284, %v1276
      %v1295 = vsel %vm1287, %v1286, %v1278
      %s1296 = scalar_lea.vmem %s4, 1
      %v1297 = vld [vmem:[%s1296] ss:$8 sm:$0x3]
      %v1299 = vlaneseq
      %v1300 = vshrl.u32 %v1299, 7
      %v1301 = vsub.s32 0, %v1300
      %v1302 = vrot.slane %v1297, %v1301
      %v1303 = vlaneseq
      %v1304 = vshrl.u32 %v1303, 7
      %v1305 = vsub.s32 1, %v1304
      %v1306 = vrot.slane %v1297, %v1305
      %v1309 = vmul.f32 %v1292, %v1302
      %v1310 = vmul.f32 %v1288, %v1306
      %v1311 = vmul.f32 %v1293, %v1302
      %v1312 = vmul.f32 %v1289, %v1306
      %v1313 = vmul.f32 %v1294, %v1302
      %v1314 = vmul.f32 %v1290, %v1306
      %v1315 = vmul.f32 %v1295, %v1302
      %v1316 = vmul.f32 %v1291, %v1306
      %1317 = vset.pattern.permute.xlu0 1
      %1318 = vperm.xlu0 %1317, %v1231
      %v1319 = vpop.permute.xlu0 %1318
      %1321 = vset.pattern.permute.xlu0 1
      %1322 = vperm.xlu0 %1321, %v1232
      %v1323 = vpop.permute.xlu0 %1322
      %1325 = vset.pattern.permute.xlu0 1
      %1326 = vperm.xlu0 %1325, %v1233
      %v1327 = vpop.permute.xlu0 %1326
      %1329 = vset.pattern.permute.xlu0 1
      %1330 = vperm.xlu0 %1329, %v1234
      %v1331 = vpop.permute.xlu0 %1330
      %v1333 = vmul.f32 %v1309, %v1319
      %v1334 = vmul.f32 %v1310, %v1319
      %v1335 = vmul.f32 %v1311, %v1323
      %v1336 = vmul.f32 %v1312, %v1323
      %v1337 = vmul.f32 %v1313, %v1327
      %v1338 = vmul.f32 %v1314, %v1327
      %v1339 = vmul.f32 %v1315, %v1331
      %v1340 = vmul.f32 %v1316, %v1331
      %v1341 = vadd.f32 %v1263, %v1333
      %v1342 = vadd.f32 %v1264, %v1334
      %v1343 = vadd.f32 %v1265, %v1335
      %v1344 = vadd.f32 %v1266, %v1336
      %v1345 = vadd.f32 %v1267, %v1337
      %v1346 = vadd.f32 %v1268, %v1338
      %v1347 = vadd.f32 %v1269, %v1339
      %v1348 = vadd.f32 %v1270, %v1340
      %1349 = vrot.lane.b32.xlu0 %v1176, 15
      %v1350 = vpop.permute.xlu0 %1349
      %1351 = vrot.lane.b32.xlu0 %v1178, 15
      %v1352 = vpop.permute.xlu0 %1351
      %1353 = vrot.lane.b32.xlu0 %v1180, 15
      %v1354 = vpop.permute.xlu0 %1353
      %1355 = vrot.lane.b32.xlu0 %v1182, 15
      %v1356 = vpop.permute.xlu0 %1355
      %1357 = vrot.lane.b32.xlu0 %v1177, 15
      %v1358 = vpop.permute.xlu0 %1357
      %1359 = vrot.lane.b32.xlu0 %v1179, 15
      %v1360 = vpop.permute.xlu0 %1359
      %1361 = vrot.lane.b32.xlu0 %v1181, 15
      %v1362 = vpop.permute.xlu0 %1361
      %1363 = vrot.lane.b32.xlu0 %v1183, 15
      %v1364 = vpop.permute.xlu0 %1363
      %vm1365 = vcmp.lt.s32.totalorder %v1201, 15
      %v1366 = vsel %vm1365, %v1350, %v1358
      %v1367 = vsel %vm1365, %v1352, %v1360
      %v1368 = vsel %vm1365, %v1354, %v1362
      %v1369 = vsel %vm1365, %v1356, %v1364
      %v1370 = vsel %vm1365, %v1358, %v1350
      %v1371 = vsel %vm1365, %v1360, %v1352
      %v1372 = vsel %vm1365, %v1362, %v1354
      %v1373 = vsel %vm1365, %v1364, %v1356
      %s1374 = scalar_lea.vmem %s4, 2
      %v1375 = vld [vmem:[%s1374] ss:$8 sm:$0x3]
      %v1377 = vlaneseq
      %v1378 = vshrl.u32 %v1377, 7
      %v1379 = vsub.s32 0, %v1378
      %v1380 = vrot.slane %v1375, %v1379
      %v1381 = vlaneseq
      %v1382 = vshrl.u32 %v1381, 7
      %v1383 = vsub.s32 1, %v1382
      %v1384 = vrot.slane %v1375, %v1383
      %v1387 = vmul.f32 %v1370, %v1380
      %v1388 = vmul.f32 %v1366, %v1384
      %v1389 = vmul.f32 %v1371, %v1380
      %v1390 = vmul.f32 %v1367, %v1384
      %v1391 = vmul.f32 %v1372, %v1380
      %v1392 = vmul.f32 %v1368, %v1384
      %v1393 = vmul.f32 %v1373, %v1380
      %v1394 = vmul.f32 %v1369, %v1384
      %1395 = vset.pattern.permute.xlu0 2
      %1396 = vperm.xlu0 %1395, %v1231
      %v1397 = vpop.permute.xlu0 %1396
      %1399 = vset.pattern.permute.xlu0 2
      %1400 = vperm.xlu0 %1399, %v1232
      %v1401 = vpop.permute.xlu0 %1400
      %1403 = vset.pattern.permute.xlu0 2
      %1404 = vperm.xlu0 %1403, %v1233
      %v1405 = vpop.permute.xlu0 %1404
      %1407 = vset.pattern.permute.xlu0 2
      %1408 = vperm.xlu0 %1407, %v1234
      %v1409 = vpop.permute.xlu0 %1408
      %v1411 = vmul.f32 %v1387, %v1397
      %v1412 = vmul.f32 %v1388, %v1397
      %v1413 = vmul.f32 %v1389, %v1401
      %v1414 = vmul.f32 %v1390, %v1401
      %v1415 = vmul.f32 %v1391, %v1405
      %v1416 = vmul.f32 %v1392, %v1405
      %v1417 = vmul.f32 %v1393, %v1409
      %v1418 = vmul.f32 %v1394, %v1409
      %v1419 = vadd.f32 %v1341, %v1411
      %v1420 = vadd.f32 %v1342, %v1412
      %v1421 = vadd.f32 %v1343, %v1413
      %v1422 = vadd.f32 %v1344, %v1414
      %v1423 = vadd.f32 %v1345, %v1415
      %v1424 = vadd.f32 %v1346, %v1416
      %v1425 = vadd.f32 %v1347, %v1417
      %v1426 = vadd.f32 %v1348, %v1418
      %1427 = vrot.lane.b32.xlu0 %v1176, 1
      %v1428 = vpop.permute.xlu0 %1427
      %1429 = vrot.lane.b32.xlu0 %v1178, 1
      %v1430 = vpop.permute.xlu0 %1429
      %1431 = vrot.lane.b32.xlu0 %v1180, 1
      %v1432 = vpop.permute.xlu0 %1431
      %1433 = vrot.lane.b32.xlu0 %v1182, 1
      %v1434 = vpop.permute.xlu0 %1433
      %1435 = vrot.lane.b32.xlu0 %v1177, 1
      %v1436 = vpop.permute.xlu0 %1435
      %1437 = vrot.lane.b32.xlu0 %v1179, 1
      %v1438 = vpop.permute.xlu0 %1437
      %1439 = vrot.lane.b32.xlu0 %v1181, 1
      %v1440 = vpop.permute.xlu0 %1439
      %1441 = vrot.lane.b32.xlu0 %v1183, 1
      %v1442 = vpop.permute.xlu0 %1441
      %vm1443 = vcmp.lt.s32.totalorder %v1201, 1
      %v1444 = vsel %vm1443, %v1428, %v1436
      %v1445 = vsel %vm1443, %v1430, %v1438
      %v1446 = vsel %vm1443, %v1432, %v1440
      %v1447 = vsel %vm1443, %v1434, %v1442
      %v1448 = vsel %vm1443, %v1436, %v1428
      %v1449 = vsel %vm1443, %v1438, %v1430
      %v1450 = vsel %vm1443, %v1440, %v1432
      %v1451 = vsel %vm1443, %v1442, %v1434
      %s1452 = scalar_lea.vmem %s4, 3
      %v1453 = vld [vmem:[%s1452] ss:$8 sm:$0x3]
      %v1455 = vlaneseq
      %v1456 = vshrl.u32 %v1455, 7
      %v1457 = vsub.s32 0, %v1456
      %v1458 = vrot.slane %v1453, %v1457
      %v1459 = vlaneseq
      %v1460 = vshrl.u32 %v1459, 7
      %v1461 = vsub.s32 1, %v1460
      %v1462 = vrot.slane %v1453, %v1461
      %v1465 = vmul.f32 %v1448, %v1458
      %v1466 = vmul.f32 %v1444, %v1462
      %v1467 = vmul.f32 %v1449, %v1458
      %v1468 = vmul.f32 %v1445, %v1462
      %v1469 = vmul.f32 %v1450, %v1458
      %v1470 = vmul.f32 %v1446, %v1462
      %v1471 = vmul.f32 %v1451, %v1458
      %v1472 = vmul.f32 %v1447, %v1462
      %1473 = vset.pattern.permute.xlu0 3
      %1474 = vperm.xlu0 %1473, %v1231
      %v1475 = vpop.permute.xlu0 %1474
      %1477 = vset.pattern.permute.xlu0 3
      %1478 = vperm.xlu0 %1477, %v1232
      %v1479 = vpop.permute.xlu0 %1478
      %1481 = vset.pattern.permute.xlu0 3
      %1482 = vperm.xlu0 %1481, %v1233
      %v1483 = vpop.permute.xlu0 %1482
      %1485 = vset.pattern.permute.xlu0 3
      %1486 = vperm.xlu0 %1485, %v1234
      %v1487 = vpop.permute.xlu0 %1486
      %v1489 = vmul.f32 %v1465, %v1475
      %v1490 = vmul.f32 %v1466, %v1475
      %v1491 = vmul.f32 %v1467, %v1479
      %v1492 = vmul.f32 %v1468, %v1479
      %v1493 = vmul.f32 %v1469, %v1483
      %v1494 = vmul.f32 %v1470, %v1483
      %v1495 = vmul.f32 %v1471, %v1487
      %v1496 = vmul.f32 %v1472, %v1487
      %v1497 = vadd.f32 %v1419, %v1489
      %v1498 = vadd.f32 %v1420, %v1490
      %v1499 = vadd.f32 %v1421, %v1491
      %v1500 = vadd.f32 %v1422, %v1492
      %v1501 = vadd.f32 %v1423, %v1493
      %v1502 = vadd.f32 %v1424, %v1494
      %v1503 = vadd.f32 %v1425, %v1495
      %v1504 = vadd.f32 %v1426, %v1496
      %s1505 = scalar_lea.vmem %s4, 4
      %v1506 = vld [vmem:[%s1505] ss:$8 sm:$0x3]
      %v1508 = vlaneseq
      %v1509 = vshrl.u32 %v1508, 7
      %v1510 = vsub.s32 0, %v1509
      %v1511 = vrot.slane %v1506, %v1510
      %v1512 = vlaneseq
      %v1513 = vshrl.u32 %v1512, 7
      %v1514 = vsub.s32 1, %v1513
      %v1515 = vrot.slane %v1506, %v1514
      %v1518 = vmul.f32 %v1176, %v1511
      %v1519 = vmul.f32 %v1177, %v1515
      %v1520 = vmul.f32 %v1178, %v1511
      %v1521 = vmul.f32 %v1179, %v1515
      %v1522 = vmul.f32 %v1180, %v1511
      %v1523 = vmul.f32 %v1181, %v1515
      %v1524 = vmul.f32 %v1182, %v1511
      %v1525 = vmul.f32 %v1183, %v1515
      %1526 = vset.pattern.permute.xlu0 4
      %1527 = vperm.xlu0 %1526, %v1231
      %v1528 = vpop.permute.xlu0 %1527
      %1530 = vset.pattern.permute.xlu0 4
      %1531 = vperm.xlu0 %1530, %v1232
      %v1532 = vpop.permute.xlu0 %1531
      %1534 = vset.pattern.permute.xlu0 4
      %1535 = vperm.xlu0 %1534, %v1233
      %v1536 = vpop.permute.xlu0 %1535
      %1538 = vset.pattern.permute.xlu0 4
      %1539 = vperm.xlu0 %1538, %v1234
      %v1540 = vpop.permute.xlu0 %1539
      %v1542 = vmul.f32 %v1518, %v1528
      %v1543 = vmul.f32 %v1519, %v1528
      %v1544 = vmul.f32 %v1520, %v1532
      %v1545 = vmul.f32 %v1521, %v1532
      %v1546 = vmul.f32 %v1522, %v1536
      %v1547 = vmul.f32 %v1523, %v1536
      %v1548 = vmul.f32 %v1524, %v1540
      %v1549 = vmul.f32 %v1525, %v1540
      %v1550 = vadd.f32 %v1497, %v1542
      %v1551 = vadd.f32 %v1498, %v1543
      %v1552 = vadd.f32 %v1499, %v1544
      %v1553 = vadd.f32 %v1500, %v1545
      %v1554 = vadd.f32 %v1501, %v1546
      %v1555 = vadd.f32 %v1502, %v1547
      %v1556 = vadd.f32 %v1503, %v1548
      %v1557 = vadd.f32 %v1504, %v1549
      %1558 = vrot.lane.b32.xlu0 %v1176, 127
      %v1559 = vpop.permute.xlu0 %1558
      %1560 = vrot.lane.b32.xlu0 %v1178, 127
      %v1561 = vpop.permute.xlu0 %1560
      %1562 = vrot.lane.b32.xlu0 %v1180, 127
      %v1563 = vpop.permute.xlu0 %1562
      %1564 = vrot.lane.b32.xlu0 %v1182, 127
      %v1565 = vpop.permute.xlu0 %1564
      %1566 = vrot.lane.b32.xlu0 %v1177, 127
      %v1567 = vpop.permute.xlu0 %1566
      %1568 = vrot.lane.b32.xlu0 %v1179, 127
      %v1569 = vpop.permute.xlu0 %1568
      %1570 = vrot.lane.b32.xlu0 %v1181, 127
      %v1571 = vpop.permute.xlu0 %1570
      %1572 = vrot.lane.b32.xlu0 %v1183, 127
      %v1573 = vpop.permute.xlu0 %1572
      %vm1574 = vcmp.lt.s32.totalorder %v1201, 127
      %v1575 = vsel %vm1574, %v1559, %v1567
      %v1576 = vsel %vm1574, %v1561, %v1569
      %v1577 = vsel %vm1574, %v1563, %v1571
      %v1578 = vsel %vm1574, %v1565, %v1573
      %v1579 = vsel %vm1574, %v1567, %v1559
      %v1580 = vsel %vm1574, %v1569, %v1561
      %v1581 = vsel %vm1574, %v1571, %v1563
      %v1582 = vsel %vm1574, %v1573, %v1565
      %s1583 = scalar_lea.vmem %s4, 5
      %v1584 = vld [vmem:[%s1583] ss:$8 sm:$0x3]
      %v1586 = vlaneseq
      %v1587 = vshrl.u32 %v1586, 7
      %v1588 = vsub.s32 0, %v1587
      %v1589 = vrot.slane %v1584, %v1588
      %v1590 = vlaneseq
      %v1591 = vshrl.u32 %v1590, 7
      %v1592 = vsub.s32 1, %v1591
      %v1593 = vrot.slane %v1584, %v1592
      %v1596 = vmul.f32 %v1575, %v1589
      %v1597 = vmul.f32 %v1579, %v1593
      %v1598 = vmul.f32 %v1576, %v1589
      %v1599 = vmul.f32 %v1580, %v1593
      %v1600 = vmul.f32 %v1577, %v1589
      %v1601 = vmul.f32 %v1581, %v1593
      %v1602 = vmul.f32 %v1578, %v1589
      %v1603 = vmul.f32 %v1582, %v1593
      %1604 = vset.pattern.permute.xlu0 5
      %1605 = vperm.xlu0 %1604, %v1231
      %v1606 = vpop.permute.xlu0 %1605
      %1608 = vset.pattern.permute.xlu0 5
      %1609 = vperm.xlu0 %1608, %v1232
      %v1610 = vpop.permute.xlu0 %1609
      %1612 = vset.pattern.permute.xlu0 5
      %1613 = vperm.xlu0 %1612, %v1233
      %v1614 = vpop.permute.xlu0 %1613
      %1616 = vset.pattern.permute.xlu0 5
      %1617 = vperm.xlu0 %1616, %v1234
      %v1618 = vpop.permute.xlu0 %1617
      %v1620 = vmul.f32 %v1596, %v1606
      %v1621 = vmul.f32 %v1597, %v1606
      %v1622 = vmul.f32 %v1598, %v1610
      %v1623 = vmul.f32 %v1599, %v1610
      %v1624 = vmul.f32 %v1600, %v1614
      %v1625 = vmul.f32 %v1601, %v1614
      %v1626 = vmul.f32 %v1602, %v1618
      %v1627 = vmul.f32 %v1603, %v1618
      %v1628 = vadd.f32 %v1550, %v1620
      %v1629 = vadd.f32 %v1551, %v1621
      %v1630 = vadd.f32 %v1552, %v1622
      %v1631 = vadd.f32 %v1553, %v1623
      %v1632 = vadd.f32 %v1554, %v1624
      %v1633 = vadd.f32 %v1555, %v1625
      %v1634 = vadd.f32 %v1556, %v1626
      %v1635 = vadd.f32 %v1557, %v1627
      %1636 = vrot.lane.b32.xlu0 %v1176, 113
      %v1637 = vpop.permute.xlu0 %1636
      %1638 = vrot.lane.b32.xlu0 %v1178, 113
      %v1639 = vpop.permute.xlu0 %1638
      %1640 = vrot.lane.b32.xlu0 %v1180, 113
      %v1641 = vpop.permute.xlu0 %1640
      %1642 = vrot.lane.b32.xlu0 %v1182, 113
      %v1643 = vpop.permute.xlu0 %1642
      %1644 = vrot.lane.b32.xlu0 %v1177, 113
      %v1645 = vpop.permute.xlu0 %1644
      %1646 = vrot.lane.b32.xlu0 %v1179, 113
      %v1647 = vpop.permute.xlu0 %1646
      %1648 = vrot.lane.b32.xlu0 %v1181, 113
      %v1649 = vpop.permute.xlu0 %1648
      %1650 = vrot.lane.b32.xlu0 %v1183, 113
      %v1651 = vpop.permute.xlu0 %1650
      %vm1652 = vcmp.lt.s32.totalorder %v1201, 113
      %v1653 = vsel %vm1652, %v1637, %v1645
      %v1654 = vsel %vm1652, %v1639, %v1647
      %v1655 = vsel %vm1652, %v1641, %v1649
      %v1656 = vsel %vm1652, %v1643, %v1651
      %v1657 = vsel %vm1652, %v1645, %v1637
      %v1658 = vsel %vm1652, %v1647, %v1639
      %v1659 = vsel %vm1652, %v1649, %v1641
      %v1660 = vsel %vm1652, %v1651, %v1643
      %s1661 = scalar_lea.vmem %s4, 6
      %v1662 = vld [vmem:[%s1661] ss:$8 sm:$0x3]
      %v1664 = vlaneseq
      %v1665 = vshrl.u32 %v1664, 7
      %v1666 = vsub.s32 0, %v1665
      %v1667 = vrot.slane %v1662, %v1666
      %v1668 = vlaneseq
      %v1669 = vshrl.u32 %v1668, 7
      %v1670 = vsub.s32 1, %v1669
      %v1671 = vrot.slane %v1662, %v1670
      %v1674 = vmul.f32 %v1653, %v1667
      %v1675 = vmul.f32 %v1657, %v1671
      %v1676 = vmul.f32 %v1654, %v1667
      %v1677 = vmul.f32 %v1658, %v1671
      %v1678 = vmul.f32 %v1655, %v1667
      %v1679 = vmul.f32 %v1659, %v1671
      %v1680 = vmul.f32 %v1656, %v1667
      %v1681 = vmul.f32 %v1660, %v1671
      %1682 = vset.pattern.permute.xlu0 6
      %1683 = vperm.xlu0 %1682, %v1231
      %v1684 = vpop.permute.xlu0 %1683
      %1686 = vset.pattern.permute.xlu0 6
      %1687 = vperm.xlu0 %1686, %v1232
      %v1688 = vpop.permute.xlu0 %1687
      %1690 = vset.pattern.permute.xlu0 6
      %1691 = vperm.xlu0 %1690, %v1233
      %v1692 = vpop.permute.xlu0 %1691
      %1694 = vset.pattern.permute.xlu0 6
      %1695 = vperm.xlu0 %1694, %v1234
      %v1696 = vpop.permute.xlu0 %1695
      %v1698 = vmul.f32 %v1674, %v1684
      %v1699 = vmul.f32 %v1675, %v1684
      %v1700 = vmul.f32 %v1676, %v1688
      %v1701 = vmul.f32 %v1677, %v1688
      %v1702 = vmul.f32 %v1678, %v1692
      %v1703 = vmul.f32 %v1679, %v1692
      %v1704 = vmul.f32 %v1680, %v1696
      %v1705 = vmul.f32 %v1681, %v1696
      %v1706 = vadd.f32 %v1628, %v1698
      %v1707 = vadd.f32 %v1629, %v1699
      %v1708 = vadd.f32 %v1630, %v1700
      %v1709 = vadd.f32 %v1631, %v1701
      %v1710 = vadd.f32 %v1632, %v1702
      %v1711 = vadd.f32 %v1633, %v1703
      %v1712 = vadd.f32 %v1634, %v1704
      %v1713 = vadd.f32 %v1635, %v1705
      %1714 = vrot.lane.b32.xlu0 %v1176, 112
      %v1715 = vpop.permute.xlu0 %1714
      %1716 = vrot.lane.b32.xlu0 %v1178, 112
      %v1717 = vpop.permute.xlu0 %1716
      %1718 = vrot.lane.b32.xlu0 %v1180, 112
      %v1719 = vpop.permute.xlu0 %1718
      %1720 = vrot.lane.b32.xlu0 %v1182, 112
      %v1721 = vpop.permute.xlu0 %1720
      %1722 = vrot.lane.b32.xlu0 %v1177, 112
      %v1723 = vpop.permute.xlu0 %1722
      %1724 = vrot.lane.b32.xlu0 %v1179, 112
      %v1725 = vpop.permute.xlu0 %1724
      %1726 = vrot.lane.b32.xlu0 %v1181, 112
      %v1727 = vpop.permute.xlu0 %1726
      %1728 = vrot.lane.b32.xlu0 %v1183, 112
      %v1729 = vpop.permute.xlu0 %1728
      %vm1730 = vcmp.lt.s32.totalorder %v1201, 112
      %v1731 = vsel %vm1730, %v1715, %v1723
      %v1732 = vsel %vm1730, %v1717, %v1725
      %v1733 = vsel %vm1730, %v1719, %v1727
      %v1734 = vsel %vm1730, %v1721, %v1729
      %v1735 = vsel %vm1730, %v1723, %v1715
      %v1736 = vsel %vm1730, %v1725, %v1717
      %v1737 = vsel %vm1730, %v1727, %v1719
      %v1738 = vsel %vm1730, %v1729, %v1721
      %s1739 = scalar_lea.vmem %s4, 7
      %v1740 = vld [vmem:[%s1739] ss:$8 sm:$0x3]
      %v1742 = vlaneseq
      %v1743 = vshrl.u32 %v1742, 7
      %v1744 = vsub.s32 0, %v1743
      %v1745 = vrot.slane %v1740, %v1744
      %v1746 = vlaneseq
      %v1747 = vshrl.u32 %v1746, 7
      %v1748 = vsub.s32 1, %v1747
      %v1749 = vrot.slane %v1740, %v1748
      %v1752 = vmul.f32 %v1731, %v1745
      %v1753 = vmul.f32 %v1735, %v1749
      %v1754 = vmul.f32 %v1732, %v1745
      %v1755 = vmul.f32 %v1736, %v1749
      %v1756 = vmul.f32 %v1733, %v1745
      %v1757 = vmul.f32 %v1737, %v1749
      %v1758 = vmul.f32 %v1734, %v1745
      %v1759 = vmul.f32 %v1738, %v1749
      %1760 = vset.pattern.permute.xlu0 7
      %1761 = vperm.xlu0 %1760, %v1231
      %v1762 = vpop.permute.xlu0 %1761
      %1764 = vset.pattern.permute.xlu0 7
      %1765 = vperm.xlu0 %1764, %v1232
      %v1766 = vpop.permute.xlu0 %1765
      %1768 = vset.pattern.permute.xlu0 7
      %1769 = vperm.xlu0 %1768, %v1233
      %v1770 = vpop.permute.xlu0 %1769
      %1772 = vset.pattern.permute.xlu0 7
      %1773 = vperm.xlu0 %1772, %v1234
      %v1774 = vpop.permute.xlu0 %1773
      %v1776 = vmul.f32 %v1752, %v1762
      %v1777 = vmul.f32 %v1753, %v1762
      %v1778 = vmul.f32 %v1754, %v1766
      %v1779 = vmul.f32 %v1755, %v1766
      %v1780 = vmul.f32 %v1756, %v1770
      %v1781 = vmul.f32 %v1757, %v1770
      %v1782 = vmul.f32 %v1758, %v1774
      %v1783 = vmul.f32 %v1759, %v1774
      %v1784 = vadd.f32 %v1706, %v1776
      %v1785 = vadd.f32 %v1707, %v1777
      %v1786 = vadd.f32 %v1708, %v1778
      %v1787 = vadd.f32 %v1709, %v1779
      %v1788 = vadd.f32 %v1710, %v1780
      %v1789 = vadd.f32 %v1711, %v1781
      %v1790 = vadd.f32 %v1712, %v1782
      %v1791 = vadd.f32 %v1713, %v1783
      %1792 = vrot.lane.b32.xlu0 %v1176, 111
      %v1793 = vpop.permute.xlu0 %1792
      %1794 = vrot.lane.b32.xlu0 %v1178, 111
      %v1795 = vpop.permute.xlu0 %1794
      %1796 = vrot.lane.b32.xlu0 %v1180, 111
      %v1797 = vpop.permute.xlu0 %1796
      %1798 = vrot.lane.b32.xlu0 %v1182, 111
      %v1799 = vpop.permute.xlu0 %1798
      %1800 = vrot.lane.b32.xlu0 %v1177, 111
      %v1801 = vpop.permute.xlu0 %1800
      %1802 = vrot.lane.b32.xlu0 %v1179, 111
      %v1803 = vpop.permute.xlu0 %1802
      %1804 = vrot.lane.b32.xlu0 %v1181, 111
      %v1805 = vpop.permute.xlu0 %1804
      %1806 = vrot.lane.b32.xlu0 %v1183, 111
      %v1807 = vpop.permute.xlu0 %1806
      %vm1808 = vcmp.lt.s32.totalorder %v1201, 111
      %v1809 = vsel %vm1808, %v1793, %v1801
      %v1810 = vsel %vm1808, %v1795, %v1803
      %v1811 = vsel %vm1808, %v1797, %v1805
      %v1812 = vsel %vm1808, %v1799, %v1807
      %v1813 = vsel %vm1808, %v1801, %v1793
      %v1814 = vsel %vm1808, %v1803, %v1795
      %v1815 = vsel %vm1808, %v1805, %v1797
      %v1816 = vsel %vm1808, %v1807, %v1799
      %s1817 = scalar_lea.vmem %s4, 16
      %v1818 = vld [vmem:[%s1817] ss:$8 sm:$0x3]
      %v1820 = vlaneseq
      %v1821 = vshrl.u32 %v1820, 7
      %v1822 = vsub.s32 0, %v1821
      %v1823 = vrot.slane %v1818, %v1822
      %v1824 = vlaneseq
      %v1825 = vshrl.u32 %v1824, 7
      %v1826 = vsub.s32 1, %v1825
      %v1827 = vrot.slane %v1818, %v1826
      %v1830 = vmul.f32 %v1809, %v1823
      %v1831 = vmul.f32 %v1813, %v1827
      %v1832 = vmul.f32 %v1810, %v1823
      %v1833 = vmul.f32 %v1814, %v1827
      %v1834 = vmul.f32 %v1811, %v1823
      %v1835 = vmul.f32 %v1815, %v1827
      %v1836 = vmul.f32 %v1812, %v1823
      %v1837 = vmul.f32 %v1816, %v1827
      %1838 = vset.pattern.permute.xlu0 8
      %1839 = vperm.xlu0 %1838, %v1231
      %v1840 = vpop.permute.xlu0 %1839
      %1842 = vset.pattern.permute.xlu0 8
      %1843 = vperm.xlu0 %1842, %v1232
      %v1844 = vpop.permute.xlu0 %1843
      %1846 = vset.pattern.permute.xlu0 8
      %1847 = vperm.xlu0 %1846, %v1233
      %v1848 = vpop.permute.xlu0 %1847
      %1850 = vset.pattern.permute.xlu0 8
      %1851 = vperm.xlu0 %1850, %v1234
      %v1852 = vpop.permute.xlu0 %1851
      %v1854 = vmul.f32 %v1830, %v1840
      %v1855 = vmul.f32 %v1831, %v1840
      %v1856 = vmul.f32 %v1832, %v1844
      %v1857 = vmul.f32 %v1833, %v1844
      %v1858 = vmul.f32 %v1834, %v1848
      %v1859 = vmul.f32 %v1835, %v1848
      %v1860 = vmul.f32 %v1836, %v1852
      %v1861 = vmul.f32 %v1837, %v1852
      %v1862 = vadd.f32 %v1784, %v1854
      %v1863 = vadd.f32 %v1785, %v1855
      %v1864 = vadd.f32 %v1786, %v1856
      %v1865 = vadd.f32 %v1787, %v1857
      %v1866 = vadd.f32 %v1788, %v1858
      %v1867 = vadd.f32 %v1789, %v1859
      %v1868 = vadd.f32 %v1790, %v1860
      %v1869 = vadd.f32 %v1791, %v1861
      %v1870 = vld [vmem:[%s5] sm:$0xff]
      %v1871 = vld [vmem:[%s5 + $0x8] sm:$0xff]
      %v1872 = vld [vmem:[%s5 + $0x10] sm:$0xff]
      %v1873 = vld [vmem:[%s5 + $0x18] sm:$0xff]
      %1875 = vset.pattern.permute.xlu0 0
      %1876 = vperm.xlu0 %1875, %v1870
      %v1877 = vpop.permute.xlu0 %1876
      %1880 = vset.pattern.permute.xlu0 0
      %1881 = vperm.xlu0 %1880, %v1871
      %v1882 = vpop.permute.xlu0 %1881
      %1885 = vset.pattern.permute.xlu0 0
      %1886 = vperm.xlu0 %1885, %v1872
      %v1887 = vpop.permute.xlu0 %1886
      %1890 = vset.pattern.permute.xlu0 0
      %1891 = vperm.xlu0 %1890, %v1873
      %v1892 = vpop.permute.xlu0 %1891
      %v1894 = vmul.f32 %v1862, %v1877
      %v1895 = vmul.f32 %v1863, %v1877
      %v1896 = vmul.f32 %v1864, %v1882
      %v1897 = vmul.f32 %v1865, %v1882
      %v1898 = vmul.f32 %v1866, %v1887
      %v1899 = vmul.f32 %v1867, %v1887
      %v1900 = vmul.f32 %v1868, %v1892
      %v1901 = vmul.f32 %v1869, %v1892
      %1902 = vset.pattern.permute.xlu0 1
      %1903 = vperm.xlu0 %1902, %v1870
      %v1904 = vpop.permute.xlu0 %1903
      %1906 = vset.pattern.permute.xlu0 1
      %1907 = vperm.xlu0 %1906, %v1871
      %v1908 = vpop.permute.xlu0 %1907
      %1910 = vset.pattern.permute.xlu0 1
      %1911 = vperm.xlu0 %1910, %v1872
      %v1912 = vpop.permute.xlu0 %1911
      %1914 = vset.pattern.permute.xlu0 1
      %1915 = vperm.xlu0 %1914, %v1873
      %v1916 = vpop.permute.xlu0 %1915
      %v1918 = vadd.f32 %v1894, %v1904
      %v1919 = vadd.f32 %v1895, %v1904
      %v1920 = vadd.f32 %v1896, %v1908
      %v1921 = vadd.f32 %v1897, %v1908
      %v1922 = vadd.f32 %v1898, %v1912
      %v1923 = vadd.f32 %v1899, %v1912
      %v1924 = vadd.f32 %v1900, %v1916
      %v1925 = vadd.f32 %v1901, %v1916
      %v1926 = vxor.u32 %v1918, 2147483648
      %v1927 = vxor.u32 %v1919, 2147483648
      %v1928 = vxor.u32 %v1920, 2147483648
      %v1929 = vxor.u32 %v1921, 2147483648
      %v1930 = vxor.u32 %v1922, 2147483648
      %v1931 = vxor.u32 %v1923, 2147483648
      %v1932 = vxor.u32 %v1924, 2147483648
      %v1933 = vxor.u32 %v1925, 2147483648
      %v1934 = vmul.f32 %v1926, 1.442695
      %v1935 = vpow.pop %v1934
      %v1936 = vmul.f32 %v1927, 1.442695
      %v1937 = vpow.pop %v1936
      %v1938 = vmul.f32 %v1928, 1.442695
      %v1939 = vpow.pop %v1938
      %v1940 = vmul.f32 %v1929, 1.442695
      %v1941 = vpow.pop %v1940
      %v1942 = vmul.f32 %v1930, 1.442695
      %v1943 = vpow.pop %v1942
      %v1944 = vmul.f32 %v1931, 1.442695
      %v1945 = vpow.pop %v1944
      %v1946 = vmul.f32 %v1932, 1.442695
      %v1947 = vpow.pop %v1946
      %v1948 = vmul.f32 %v1933, 1.442695
      %v1949 = vpow.pop %v1948
      %v1950 = vadd.f32 %v1935, 1.0
      %v1951 = vadd.f32 %v1937, 1.0
      %v1952 = vadd.f32 %v1939, 1.0
      %v1953 = vadd.f32 %v1941, 1.0
      %v1954 = vadd.f32 %v1943, 1.0
      %v1955 = vadd.f32 %v1945, 1.0
      %v1956 = vadd.f32 %v1947, 1.0
      %v1957 = vadd.f32 %v1949, 1.0
      %v1958 = vrcp.pop %v1950
      %v1959 = vmul.f32 1.0, %v1958
      %v1960 = vrcp.pop %v1951
      %v1961 = vmul.f32 1.0, %v1960
      %v1962 = vrcp.pop %v1952
      %v1963 = vmul.f32 1.0, %v1962
      %v1964 = vrcp.pop %v1953
      %v1965 = vmul.f32 1.0, %v1964
      %v1966 = vrcp.pop %v1954
      %v1967 = vmul.f32 1.0, %v1966
      %v1968 = vrcp.pop %v1955
      %v1969 = vmul.f32 1.0, %v1968
      %v1970 = vrcp.pop %v1956
      %v1971 = vmul.f32 1.0, %v1970
      %v1972 = vrcp.pop %v1957
      %v1973 = vmul.f32 1.0, %v1972
      %v1974 = vmul.f32 %v1918, %v1959
      %v1975 = vmul.f32 %v1919, %v1961
      %v1976 = vmul.f32 %v1920, %v1963
      %v1977 = vmul.f32 %v1921, %v1965
      %v1978 = vmul.f32 %v1922, %v1967
      %v1979 = vmul.f32 %v1923, %v1969
      %v1980 = vmul.f32 %v1924, %v1971
      %v1981 = vmul.f32 %v1925, %v1973
      %v1982 = vld [vmem:[%s6] sm:$0x3]
      %v1984 = vlaneseq
      %v1985 = vshrl.u32 %v1984, 7
      %v1986 = vsub.s32 0, %v1985
      %v1987 = vrot.slane %v1982, %v1986
      %v1988 = vlaneseq
      %v1989 = vshrl.u32 %v1988, 7
      %v1990 = vsub.s32 1, %v1989
      %v1991 = vrot.slane %v1982, %v1990
      %v1994 = vmul.f32 %v1974, %v1987
      %v1995 = vmul.f32 %v1975, %v1991
      %v1996 = vmul.f32 %v1976, %v1987
      %v1997 = vmul.f32 %v1977, %v1991
      %v1998 = vmul.f32 %v1978, %v1987
      %v1999 = vmul.f32 %v1979, %v1991
      %v2000 = vmul.f32 %v1980, %v1987
      %v2001 = vmul.f32 %v1981, %v1991
      %v2002 = vadd.f32 %v1994, %v1995
      %2003 = vadd.xlane.f32.xlu0 %v2002
      %v2004 = vpop.xlane.xlu0 %2003
      %v2005 = vadd.f32 %v1996, %v1997
      %2006 = vadd.xlane.f32.xlu0 %v2005
      %v2007 = vpop.xlane.xlu0 %2006
      %v2008 = vadd.f32 %v1998, %v1999
      %2009 = vadd.xlane.f32.xlu0 %v2008
      %v2010 = vpop.xlane.xlu0 %2009
      %v2011 = vadd.f32 %v2000, %v2001
      %2012 = vadd.xlane.f32.xlu0 %v2011
      %v2013 = vpop.xlane.xlu0 %2012
      %v2014 = vld [vmem:[%s7] sm:$0xff]
      %v2015 = vld [vmem:[%s7 + $0x8] sm:$0xff]
      %v2016 = vld [vmem:[%s7 + $0x10] sm:$0xff]
      %v2017 = vld [vmem:[%s7 + $0x18] sm:$0xff]
      %v2018 = vmul.f32 %v2004, %v2014
      %v2019 = vmul.f32 %v2007, %v2015
      %v2020 = vmul.f32 %v2010, %v2016
      %v2021 = vmul.f32 %v2013, %v2017
      %vm2022 = vcmask 15360
      %v2023 = vsel %vm2022, %v2018, 0.0
      %v2024 = vsel %vm2022, %v2019, 0.0
      %v2025 = vadd.f32 %v2023, %v2024
      %v2026 = vsel %vm2022, %v2020, 0.0
      %v2027 = vadd.f32 %v2025, %v2026
      %v2028 = vsel %vm2022, %v2021, 0.0
      %v2029 = vadd.f32 %v2027, %v2028
      %v2030 = vrot.slane %v2029, 4
      %v2031 = vadd.f32 %v2029, %v2030
      %v2032 = vrot.slane %v2031, 2
      %v2033 = vadd.f32 %v2031, %v2032
      %v2034 = vrot.slane %v2033, 1
      %v2035 = vadd.f32 %v2033, %v2034
      %v2036 = vld [vmem:[%s8] sm:$0x1]
      %v2037 = vadd.f32 %v2035, %v2036
      %v2038 = vxor.u32 %v2037, 2147483648
      %v2039 = vmul.f32 %v2038, 1.442695
      %v2040 = vpow.pop %v2039
      %v2041 = vadd.f32 %v2040, 1.0
      %v2042 = vrcp.pop %v2041
      %v2043 = vmul.f32 1.0, %v2042
      %v2044 = vmul.f32 %v2037, %v2043
      %v2045 = vld [vmem:[%s9] sm:$0xff]
      %v2046 = vld [vmem:[%s9 + $0x8] sm:$0xff]
      %v2047 = vld [vmem:[%s9 + $0x10] sm:$0xff]
      %v2048 = vld [vmem:[%s9 + $0x18] sm:$0xff]
      %v2049 = vlaneseq
      %v2050 = vshrl.u32 %v2049, 7
      %v2051 = vsub.s32 0, %v2050
      %v2052 = vrot.slane %v2044, %v2051
      %v2053 = vmul.f32 %v2052, %v2045
      %v2054 = vmul.f32 %v2052, %v2046
      %v2055 = vmul.f32 %v2052, %v2047
      %v2056 = vmul.f32 %v2052, %v2048
      %v2057 = vsel %vm2022, %v2053, 0.0
      %2058 = vadd.xlane.f32.xlu0 %v2057
      %v2059 = vpop.xlane.xlu0 %2058
      %v2060 = vsel %vm2022, %v2054, 0.0
      %2061 = vadd.xlane.f32.xlu0 %v2060
      %v2062 = vpop.xlane.xlu0 %2061
      %v2063 = vsel %vm2022, %v2055, 0.0
      %2064 = vadd.xlane.f32.xlu0 %v2063
      %v2065 = vpop.xlane.xlu0 %2064
      %v2066 = vsel %vm2022, %v2056, 0.0
      %2067 = vadd.xlane.f32.xlu0 %v2066
      %v2068 = vpop.xlane.xlu0 %2067
      %v2069 = vld [vmem:[%s10] sm:$0xff]
      %v2070 = vld [vmem:[%s10 + $0x8] sm:$0xff]
      %v2071 = vld [vmem:[%s10 + $0x10] sm:$0xff]
      %v2072 = vld [vmem:[%s10 + $0x18] sm:$0xff]
      %v2073 = vadd.f32 %v2059, %v2069
      %v2074 = vadd.f32 %v2062, %v2070
      %v2075 = vadd.f32 %v2065, %v2071
      %v2076 = vadd.f32 %v2068, %v2072
      %v2077 = vxor.u32 %v2073, 2147483648
      %v2078 = vxor.u32 %v2074, 2147483648
      %v2079 = vxor.u32 %v2075, 2147483648
      %v2080 = vxor.u32 %v2076, 2147483648
      %v2081 = vmul.f32 %v2077, 1.442695
      %v2082 = vpow.pop %v2081
      %v2083 = vmul.f32 %v2078, 1.442695
      %v2084 = vpow.pop %v2083
      %v2085 = vmul.f32 %v2079, 1.442695
      %v2086 = vpow.pop %v2085
      %v2087 = vmul.f32 %v2080, 1.442695
      %v2088 = vpow.pop %v2087
      %v2089 = vadd.f32 %v2082, 1.0
      %v2090 = vadd.f32 %v2084, 1.0
      %v2091 = vadd.f32 %v2086, 1.0
      %v2092 = vadd.f32 %v2088, 1.0
      %v2093 = vrcp.pop %v2089
      %v2094 = vmul.f32 1.0, %v2093
      %v2095 = vrcp.pop %v2090
      %v2096 = vmul.f32 1.0, %v2095
      %v2097 = vrcp.pop %v2091
      %v2098 = vmul.f32 1.0, %v2097
      %v2099 = vrcp.pop %v2092
      %v2100 = vmul.f32 1.0, %v2099
      %2102 = vset.pattern.permute.xlu0 0
      %2103 = vperm.xlu0 %2102, %v2094
      %v2104 = vpop.permute.xlu0 %2103
      %2107 = vset.pattern.permute.xlu0 0
      %2108 = vperm.xlu0 %2107, %v2096
      %v2109 = vpop.permute.xlu0 %2108
      %2112 = vset.pattern.permute.xlu0 0
      %2113 = vperm.xlu0 %2112, %v2098
      %v2114 = vpop.permute.xlu0 %2113
      %2117 = vset.pattern.permute.xlu0 0
      %2118 = vperm.xlu0 %2117, %v2100
      %v2119 = vpop.permute.xlu0 %2118
      %v2121 = vmul.f32 %v1974, %v2104
      %v2122 = vmul.f32 %v1975, %v2104
      %v2123 = vmul.f32 %v1976, %v2109
      %v2124 = vmul.f32 %v1977, %v2109
      %v2125 = vmul.f32 %v1978, %v2114
      %v2126 = vmul.f32 %v1979, %v2114
      %v2127 = vmul.f32 %v1980, %v2119
      %v2128 = vmul.f32 %v1981, %v2119
      %v2129 = vld [vmem:[%s11] sm:$0xff]
      %vm2130 = vcmask 261120
      %v2132 = vsel %vm2130, %v2129, 0
      %v2134 = vand.u32 %v2122, 4294901760
      %2135 = vmatprep.subr.mxu0 %v2134
      %v2136 = vand.u32 %v2121, 4294901760
      %2137 = vmatpush1.msra.mxu0 %v2136
      %v2138 = vand.u32 %v2124, 4294901760
      %2139 = vmatprep.subr.mxu0 %v2138
      %v2140 = vand.u32 %v2123, 4294901760
      %2141 = vmatpush1.msra.mxu0 %v2140
      %v2142 = vand.u32 %v2126, 4294901760
      %2143 = vmatprep.subr.mxu0 %v2142
      %v2144 = vand.u32 %v2125, 4294901760
      %2145 = vmatpush1.msra.mxu0 %v2144
      %v2146 = vand.u32 %v2128, 4294901760
      %2147 = vmatprep.subr.mxu0 %v2146
      %v2148 = vand.u32 %v2127, 4294901760
      %2149 = vmatpush1.msra.mxu0 %v2148
      %2150 = vmatprep.subr.mxu0 0.0
      %2151 = vmatpush1.msra.mxu0 0.0
      %2152 = vmatprep.subr.mxu0 0.0
      %2153 = vmatpush1.msra.mxu0 0.0
      %2154 = vmatprep.subr.mxu0 0.0
      %2155 = vmatpush1.msra.mxu0 0.0
      %2156 = vmatprep.subr.mxu0 0.0
      %2157 = vmatpush1.msra.mxu0 0.0
      %2158 = vmatprep.subr.mxu0 0.0
      %2159 = vmatpush1.msra.mxu0 0.0
      %2160 = vmatprep.subr.mxu0 0.0
      %2161 = vmatpush1.msra.mxu0 0.0
      %2162 = vmatprep.subr.mxu0 0.0
      %2163 = vmatpush1.msra.mxu0 0.0
      %2164 = vmatprep.subr.mxu0 0.0
      %2165 = vmatpush1.msra.mxu0 0.0
      %2166 = vmatprep.subr.mxu0 0.0
      %2167 = vmatpush1.msra.mxu0 0.0
      %2168 = vmatprep.subr.mxu0 0.0
      %2169 = vmatpush1.msra.mxu0 0.0
      %2170 = vmatprep.subr.mxu0 0.0
      %2171 = vmatpush1.msra.mxu0 0.0
      %2172 = vmatprep.subr.mxu0 0.0
      %2173 = vmatpush1.msra.mxu0 0.0
      %2174 = vmatprep.subr.mxu0 0.0
      %2175 = vmatpush1.msra.mxu0 0.0
      %2176 = vmatprep.subr.mxu0 0.0
      %2177 = vmatpush1.msra.mxu0 0.0
      %2178 = vmatprep.subr.mxu0 0.0
      %2179 = vmatpush1.msra.mxu0 0.0
      %2180 = vmatprep.subr.mxu0 0.0
      %2181 = vmatpush1.msra.mxu0 0.0
      %2182 = vmatprep.subr.mxu0 0.0
      %2183 = vmatpush1.msra.mxu0 0.0
      %2184 = vmatprep.subr.mxu0 0.0
      %2185 = vmatpush1.msra.mxu0 0.0
      %2186 = vmatprep.subr.mxu0 0.0
      %2187 = vmatpush1.msra.mxu0 0.0
      %2188 = vmatprep.subr.mxu0 0.0
      %2189 = vmatpush1.msra.mxu0 0.0
      %2190 = vmatprep.subr.mxu0 0.0
      %2191 = vmatpush1.msra.mxu0 0.0
      %2192 = vmatprep.subr.mxu0 0.0
      %2193 = vmatpush1.msra.mxu0 0.0
      %2194 = vmatprep.subr.mxu0 0.0
      %2195 = vmatpush1.msra.mxu0 0.0
      %2196 = vmatprep.subr.mxu0 0.0
      %2197 = vmatpush1.msra.mxu0 0.0
      %2198 = vmatprep.subr.mxu0 0.0
      %2199 = vmatpush1.msra.mxu0 0.0
      %2200 = vmatprep.subr.mxu0 0.0
      %2201 = vmatpush1.msra.mxu0 0.0
      %2202 = vmatprep.subr.mxu0 0.0
      %2203 = vmatpush1.msra.mxu0 0.0
      %2204 = vmatprep.subr.mxu0 0.0
      %2205 = vmatpush1.msra.mxu0 0.0
      %2206 = vmatprep.mubr.f32.mxu0 0.0
      %v2207 = vand.u32 %v2132, 4294901760
      %v2208 = vsub.f32 %v2132, %v2207
      %v2209 = vand.u32 %v2208, 4294901760
      %v2210 = vsub.f32 %v2208, %v2209
      %v2211 = vand.u32 %v2210, 4294901760
      %2212 = vmatmul.mubr.f32.gmra.mrb[0].mxu0 %v2211
      %v2213 = vpop.f32.mrb[0].mxu0
      %v2214 = vadd.f32 0.0, %v2213
      %v2215 = vpop.f32.mrb[0].mxu0
      %v2216 = vadd.f32 0.0, %v2215
      %2217 = vdwg.mxu0
      %v2218 = vand.u32 %v2122, 4294901760
      %v2219 = vsub.f32 %v2122, %v2218
      %v2220 = vand.u32 %v2219, 4294901760
      %v2221 = vsub.f32 %v2219, %v2220
      %v2222 = vand.u32 %v2221, 4294901760
      %2223 = vmatprep.subr.mxu0 %v2222
      %v2224 = vand.u32 %v2121, 4294901760
      %v2225 = vsub.f32 %v2121, %v2224
      %v2226 = vand.u32 %v2225, 4294901760
      %v2227 = vsub.f32 %v2225, %v2226
      %v2228 = vand.u32 %v2227, 4294901760
      %2229 = vmatpush1.msra.mxu0 %v2228
      %v2230 = vand.u32 %v2124, 4294901760
      %v2231 = vsub.f32 %v2124, %v2230
      %v2232 = vand.u32 %v2231, 4294901760
      %v2233 = vsub.f32 %v2231, %v2232
      %v2234 = vand.u32 %v2233, 4294901760
      %2235 = vmatprep.subr.mxu0 %v2234
      %v2236 = vand.u32 %v2123, 4294901760
      %v2237 = vsub.f32 %v2123, %v2236
      %v2238 = vand.u32 %v2237, 4294901760
      %v2239 = vsub.f32 %v2237, %v2238
      %v2240 = vand.u32 %v2239, 4294901760
      %2241 = vmatpush1.msra.mxu0 %v2240
      %v2242 = vand.u32 %v2126, 4294901760
      %v2243 = vsub.f32 %v2126, %v2242
      %v2244 = vand.u32 %v2243, 4294901760
      %v2245 = vsub.f32 %v2243, %v2244
      %v2246 = vand.u32 %v2245, 4294901760
      %2247 = vmatprep.subr.mxu0 %v2246
      %v2248 = vand.u32 %v2125, 4294901760
      %v2249 = vsub.f32 %v2125, %v2248
      %v2250 = vand.u32 %v2249, 4294901760
      %v2251 = vsub.f32 %v2249, %v2250
      %v2252 = vand.u32 %v2251, 4294901760
      %2253 = vmatpush1.msra.mxu0 %v2252
      %v2254 = vand.u32 %v2128, 4294901760
      %v2255 = vsub.f32 %v2128, %v2254
      %v2256 = vand.u32 %v2255, 4294901760
      %v2257 = vsub.f32 %v2255, %v2256
      %v2258 = vand.u32 %v2257, 4294901760
      %2259 = vmatprep.subr.mxu0 %v2258
      %v2260 = vand.u32 %v2127, 4294901760
      %v2261 = vsub.f32 %v2127, %v2260
      %v2262 = vand.u32 %v2261, 4294901760
      %v2263 = vsub.f32 %v2261, %v2262
      %v2264 = vand.u32 %v2263, 4294901760
      %2265 = vmatpush1.msra.mxu0 %v2264
      %2266 = vmatprep.subr.mxu0 0.0
      %2267 = vmatpush1.msra.mxu0 0.0
      %2268 = vmatprep.subr.mxu0 0.0
      %2269 = vmatpush1.msra.mxu0 0.0
      %2270 = vmatprep.subr.mxu0 0.0
      %2271 = vmatpush1.msra.mxu0 0.0
      %2272 = vmatprep.subr.mxu0 0.0
      %2273 = vmatpush1.msra.mxu0 0.0
      %2274 = vmatprep.subr.mxu0 0.0
      %2275 = vmatpush1.msra.mxu0 0.0
      %2276 = vmatprep.subr.mxu0 0.0
      %2277 = vmatpush1.msra.mxu0 0.0
      %2278 = vmatprep.subr.mxu0 0.0
      %2279 = vmatpush1.msra.mxu0 0.0
      %2280 = vmatprep.subr.mxu0 0.0
      %2281 = vmatpush1.msra.mxu0 0.0
      %2282 = vmatprep.subr.mxu0 0.0
      %2283 = vmatpush1.msra.mxu0 0.0
      %2284 = vmatprep.subr.mxu0 0.0
      %2285 = vmatpush1.msra.mxu0 0.0
      %2286 = vmatprep.subr.mxu0 0.0
      %2287 = vmatpush1.msra.mxu0 0.0
      %2288 = vmatprep.subr.mxu0 0.0
      %2289 = vmatpush1.msra.mxu0 0.0
      %2290 = vmatprep.subr.mxu0 0.0
      %2291 = vmatpush1.msra.mxu0 0.0
      %2292 = vmatprep.subr.mxu0 0.0
      %2293 = vmatpush1.msra.mxu0 0.0
      %2294 = vmatprep.subr.mxu0 0.0
      %2295 = vmatpush1.msra.mxu0 0.0
      %2296 = vmatprep.subr.mxu0 0.0
      %2297 = vmatpush1.msra.mxu0 0.0
      %2298 = vmatprep.subr.mxu0 0.0
      %2299 = vmatpush1.msra.mxu0 0.0
      %2300 = vmatprep.subr.mxu0 0.0
      %2301 = vmatpush1.msra.mxu0 0.0
      %2302 = vmatprep.subr.mxu0 0.0
      %2303 = vmatpush1.msra.mxu0 0.0
      %2304 = vmatprep.subr.mxu0 0.0
      %2305 = vmatpush1.msra.mxu0 0.0
      %2306 = vmatprep.subr.mxu0 0.0
      %2307 = vmatpush1.msra.mxu0 0.0
      %2308 = vmatprep.subr.mxu0 0.0
      %2309 = vmatpush1.msra.mxu0 0.0
      %2310 = vmatprep.subr.mxu0 0.0
      %2311 = vmatpush1.msra.mxu0 0.0
      %2312 = vmatprep.subr.mxu0 0.0
      %2313 = vmatpush1.msra.mxu0 0.0
      %2314 = vmatprep.subr.mxu0 0.0
      %2315 = vmatpush1.msra.mxu0 0.0
      %2316 = vmatprep.subr.mxu0 0.0
      %2317 = vmatpush1.msra.mxu0 0.0
      %2318 = vmatprep.subr.mxu0 0.0
      %2319 = vmatpush1.msra.mxu0 0.0
      %2320 = vmatprep.subr.mxu0 0.0
      %2321 = vmatpush1.msra.mxu0 0.0
      %2322 = vmatprep.mubr.f32.mxu0 0.0
      %v2323 = vand.u32 %v2132, 4294901760
      %2324 = vmatmul.mubr.f32.gmra.mrb[0].mxu0 %v2323
      %v2325 = vpop.f32.mrb[0].mxu0
      %v2326 = vadd.f32 %v2214, %v2325
      %v2327 = vpop.f32.mrb[0].mxu0
      %v2328 = vadd.f32 %v2216, %v2327
      %2329 = vdwg.mxu0
      %v2330 = vand.u32 %v2122, 4294901760
      %v2331 = vsub.f32 %v2122, %v2330
      %2332 = vmatprep.subr.mxu0 %v2331
      %v2333 = vand.u32 %v2121, 4294901760
      %v2334 = vsub.f32 %v2121, %v2333
      %2335 = vmatpush1.msra.mxu0 %v2334
      %v2336 = vand.u32 %v2124, 4294901760
      %v2337 = vsub.f32 %v2124, %v2336
      %2338 = vmatprep.subr.mxu0 %v2337
      %v2339 = vand.u32 %v2123, 4294901760
      %v2340 = vsub.f32 %v2123, %v2339
      %2341 = vmatpush1.msra.mxu0 %v2340
      %v2342 = vand.u32 %v2126, 4294901760
      %v2343 = vsub.f32 %v2126, %v2342
      %2344 = vmatprep.subr.mxu0 %v2343
      %v2345 = vand.u32 %v2125, 4294901760
      %v2346 = vsub.f32 %v2125, %v2345
      %2347 = vmatpush1.msra.mxu0 %v2346
      %v2348 = vand.u32 %v2128, 4294901760
      %v2349 = vsub.f32 %v2128, %v2348
      %2350 = vmatprep.subr.mxu0 %v2349
      %v2351 = vand.u32 %v2127, 4294901760
      %v2352 = vsub.f32 %v2127, %v2351
      %2353 = vmatpush1.msra.mxu0 %v2352
      %2354 = vmatprep.subr.mxu0 0.0
      %2355 = vmatpush1.msra.mxu0 0.0
      %2356 = vmatprep.subr.mxu0 0.0
      %2357 = vmatpush1.msra.mxu0 0.0
      %2358 = vmatprep.subr.mxu0 0.0
      %2359 = vmatpush1.msra.mxu0 0.0
      %2360 = vmatprep.subr.mxu0 0.0
      %2361 = vmatpush1.msra.mxu0 0.0
      %2362 = vmatprep.subr.mxu0 0.0
      %2363 = vmatpush1.msra.mxu0 0.0
      %2364 = vmatprep.subr.mxu0 0.0
      %2365 = vmatpush1.msra.mxu0 0.0
      %2366 = vmatprep.subr.mxu0 0.0
      %2367 = vmatpush1.msra.mxu0 0.0
      %2368 = vmatprep.subr.mxu0 0.0
      %2369 = vmatpush1.msra.mxu0 0.0
      %2370 = vmatprep.subr.mxu0 0.0
      %2371 = vmatpush1.msra.mxu0 0.0
      %2372 = vmatprep.subr.mxu0 0.0
      %2373 = vmatpush1.msra.mxu0 0.0
      %2374 = vmatprep.subr.mxu0 0.0
      %2375 = vmatpush1.msra.mxu0 0.0
      %2376 = vmatprep.subr.mxu0 0.0
      %2377 = vmatpush1.msra.mxu0 0.0
      %2378 = vmatprep.subr.mxu0 0.0
      %2379 = vmatpush1.msra.mxu0 0.0
      %2380 = vmatprep.subr.mxu0 0.0
      %2381 = vmatpush1.msra.mxu0 0.0
      %2382 = vmatprep.subr.mxu0 0.0
      %2383 = vmatpush1.msra.mxu0 0.0
      %2384 = vmatprep.subr.mxu0 0.0
      %2385 = vmatpush1.msra.mxu0 0.0
      %2386 = vmatprep.subr.mxu0 0.0
      %2387 = vmatpush1.msra.mxu0 0.0
      %2388 = vmatprep.subr.mxu0 0.0
      %2389 = vmatpush1.msra.mxu0 0.0
      %2390 = vmatprep.subr.mxu0 0.0
      %2391 = vmatpush1.msra.mxu0 0.0
      %2392 = vmatprep.subr.mxu0 0.0
      %2393 = vmatpush1.msra.mxu0 0.0
      %2394 = vmatprep.subr.mxu0 0.0
      %2395 = vmatpush1.msra.mxu0 0.0
      %2396 = vmatprep.subr.mxu0 0.0
      %2397 = vmatpush1.msra.mxu0 0.0
      %2398 = vmatprep.subr.mxu0 0.0
      %2399 = vmatpush1.msra.mxu0 0.0
      %2400 = vmatprep.subr.mxu0 0.0
      %2401 = vmatpush1.msra.mxu0 0.0
      %2402 = vmatprep.subr.mxu0 0.0
      %2403 = vmatpush1.msra.mxu0 0.0
      %2404 = vmatprep.subr.mxu0 0.0
      %2405 = vmatpush1.msra.mxu0 0.0
      %2406 = vmatprep.subr.mxu0 0.0
      %2407 = vmatpush1.msra.mxu0 0.0
      %2408 = vmatprep.subr.mxu0 0.0
      %2409 = vmatpush1.msra.mxu0 0.0
      %2410 = vmatprep.mubr.f32.mxu0 0.0
      %v2411 = vand.u32 %v2132, 4294901760
      %v2412 = vsub.f32 %v2132, %v2411
      %2413 = vmatmul.mubr.f32.gmra.mrb[0].mxu0 %v2412
      %v2414 = vpop.f32.mrb[0].mxu0
      %v2415 = vadd.f32 %v2326, %v2414
      %v2416 = vpop.f32.mrb[0].mxu0
      %v2417 = vadd.f32 %v2328, %v2416
      %2418 = vdwg.mxu0
      %v2419 = vand.u32 %v2122, 4294901760
      %2420 = vmatprep.subr.mxu0 %v2419
      %v2421 = vand.u32 %v2121, 4294901760
      %2422 = vmatpush1.msra.mxu0 %v2421
      %v2423 = vand.u32 %v2124, 4294901760
      %2424 = vmatprep.subr.mxu0 %v2423
      %v2425 = vand.u32 %v2123, 4294901760
      %2426 = vmatpush1.msra.mxu0 %v2425
      %v2427 = vand.u32 %v2126, 4294901760
      %2428 = vmatprep.subr.mxu0 %v2427
      %v2429 = vand.u32 %v2125, 4294901760
      %2430 = vmatpush1.msra.mxu0 %v2429
      %v2431 = vand.u32 %v2128, 4294901760
      %2432 = vmatprep.subr.mxu0 %v2431
      %v2433 = vand.u32 %v2127, 4294901760
      %2434 = vmatpush1.msra.mxu0 %v2433
      %2435 = vmatprep.subr.mxu0 0.0
      %2436 = vmatpush1.msra.mxu0 0.0
      %2437 = vmatprep.subr.mxu0 0.0
      %2438 = vmatpush1.msra.mxu0 0.0
      %2439 = vmatprep.subr.mxu0 0.0
      %2440 = vmatpush1.msra.mxu0 0.0
      %2441 = vmatprep.subr.mxu0 0.0
      %2442 = vmatpush1.msra.mxu0 0.0
      %2443 = vmatprep.subr.mxu0 0.0
      %2444 = vmatpush1.msra.mxu0 0.0
      %2445 = vmatprep.subr.mxu0 0.0
      %2446 = vmatpush1.msra.mxu0 0.0
      %2447 = vmatprep.subr.mxu0 0.0
      %2448 = vmatpush1.msra.mxu0 0.0
      %2449 = vmatprep.subr.mxu0 0.0
      %2450 = vmatpush1.msra.mxu0 0.0
      %2451 = vmatprep.subr.mxu0 0.0
      %2452 = vmatpush1.msra.mxu0 0.0
      %2453 = vmatprep.subr.mxu0 0.0
      %2454 = vmatpush1.msra.mxu0 0.0
      %2455 = vmatprep.subr.mxu0 0.0
      %2456 = vmatpush1.msra.mxu0 0.0
      %2457 = vmatprep.subr.mxu0 0.0
      %2458 = vmatpush1.msra.mxu0 0.0
      %2459 = vmatprep.subr.mxu0 0.0
      %2460 = vmatpush1.msra.mxu0 0.0
      %2461 = vmatprep.subr.mxu0 0.0
      %2462 = vmatpush1.msra.mxu0 0.0
      %2463 = vmatprep.subr.mxu0 0.0
      %2464 = vmatpush1.msra.mxu0 0.0
      %2465 = vmatprep.subr.mxu0 0.0
      %2466 = vmatpush1.msra.mxu0 0.0
      %2467 = vmatprep.subr.mxu0 0.0
      %2468 = vmatpush1.msra.mxu0 0.0
      %2469 = vmatprep.subr.mxu0 0.0
      %2470 = vmatpush1.msra.mxu0 0.0
      %2471 = vmatprep.subr.mxu0 0.0
      %2472 = vmatpush1.msra.mxu0 0.0
      %2473 = vmatprep.subr.mxu0 0.0
      %2474 = vmatpush1.msra.mxu0 0.0
      %2475 = vmatprep.subr.mxu0 0.0
      %2476 = vmatpush1.msra.mxu0 0.0
      %2477 = vmatprep.subr.mxu0 0.0
      %2478 = vmatpush1.msra.mxu0 0.0
      %2479 = vmatprep.subr.mxu0 0.0
      %2480 = vmatpush1.msra.mxu0 0.0
      %2481 = vmatprep.subr.mxu0 0.0
      %2482 = vmatpush1.msra.mxu0 0.0
      %2483 = vmatprep.subr.mxu0 0.0
      %2484 = vmatpush1.msra.mxu0 0.0
      %2485 = vmatprep.subr.mxu0 0.0
      %2486 = vmatpush1.msra.mxu0 0.0
      %2487 = vmatprep.subr.mxu0 0.0
      %2488 = vmatpush1.msra.mxu0 0.0
      %2489 = vmatprep.subr.mxu0 0.0
      %2490 = vmatpush1.msra.mxu0 0.0
      %2491 = vmatprep.mubr.f32.mxu0 0.0
      %v2492 = vand.u32 %v2132, 4294901760
      %v2493 = vsub.f32 %v2132, %v2492
      %v2494 = vand.u32 %v2493, 4294901760
      %2495 = vmatmul.mubr.f32.gmra.mrb[0].mxu0 %v2494
      %v2496 = vpop.f32.mrb[0].mxu0
      %v2497 = vadd.f32 %v2415, %v2496
      %v2498 = vpop.f32.mrb[0].mxu0
      %v2499 = vadd.f32 %v2417, %v2498
      %2500 = vdwg.mxu0
      %v2501 = vand.u32 %v2122, 4294901760
      %v2502 = vsub.f32 %v2122, %v2501
      %v2503 = vand.u32 %v2502, 4294901760
      %2504 = vmatprep.subr.mxu0 %v2503
      %v2505 = vand.u32 %v2121, 4294901760
      %v2506 = vsub.f32 %v2121, %v2505
      %v2507 = vand.u32 %v2506, 4294901760
      %2508 = vmatpush1.msra.mxu0 %v2507
      %v2509 = vand.u32 %v2124, 4294901760
      %v2510 = vsub.f32 %v2124, %v2509
      %v2511 = vand.u32 %v2510, 4294901760
      %2512 = vmatprep.subr.mxu0 %v2511
      %v2513 = vand.u32 %v2123, 4294901760
      %v2514 = vsub.f32 %v2123, %v2513
      %v2515 = vand.u32 %v2514, 4294901760
      %2516 = vmatpush1.msra.mxu0 %v2515
      %v2517 = vand.u32 %v2126, 4294901760
      %v2518 = vsub.f32 %v2126, %v2517
      %v2519 = vand.u32 %v2518, 4294901760
      %2520 = vmatprep.subr.mxu0 %v2519
      %v2521 = vand.u32 %v2125, 4294901760
      %v2522 = vsub.f32 %v2125, %v2521
      %v2523 = vand.u32 %v2522, 4294901760
      %2524 = vmatpush1.msra.mxu0 %v2523
      %v2525 = vand.u32 %v2128, 4294901760
      %v2526 = vsub.f32 %v2128, %v2525
      %v2527 = vand.u32 %v2526, 4294901760
      %2528 = vmatprep.subr.mxu0 %v2527
      %v2529 = vand.u32 %v2127, 4294901760
      %v2530 = vsub.f32 %v2127, %v2529
      %v2531 = vand.u32 %v2530, 4294901760
      %2532 = vmatpush1.msra.mxu0 %v2531
      %2533 = vmatprep.subr.mxu0 0.0
      %2534 = vmatpush1.msra.mxu0 0.0
      %2535 = vmatprep.subr.mxu0 0.0
      %2536 = vmatpush1.msra.mxu0 0.0
      %2537 = vmatprep.subr.mxu0 0.0
      %2538 = vmatpush1.msra.mxu0 0.0
      %2539 = vmatprep.subr.mxu0 0.0
      %2540 = vmatpush1.msra.mxu0 0.0
      %2541 = vmatprep.subr.mxu0 0.0
      %2542 = vmatpush1.msra.mxu0 0.0
      %2543 = vmatprep.subr.mxu0 0.0
      %2544 = vmatpush1.msra.mxu0 0.0
      %2545 = vmatprep.subr.mxu0 0.0
      %2546 = vmatpush1.msra.mxu0 0.0
      %2547 = vmatprep.subr.mxu0 0.0
      %2548 = vmatpush1.msra.mxu0 0.0
      %2549 = vmatprep.subr.mxu0 0.0
      %2550 = vmatpush1.msra.mxu0 0.0
      %2551 = vmatprep.subr.mxu0 0.0
      %2552 = vmatpush1.msra.mxu0 0.0
      %2553 = vmatprep.subr.mxu0 0.0
      %2554 = vmatpush1.msra.mxu0 0.0
      %2555 = vmatprep.subr.mxu0 0.0
      %2556 = vmatpush1.msra.mxu0 0.0
      %2557 = vmatprep.subr.mxu0 0.0
      %2558 = vmatpush1.msra.mxu0 0.0
      %2559 = vmatprep.subr.mxu0 0.0
      %2560 = vmatpush1.msra.mxu0 0.0
      %2561 = vmatprep.subr.mxu0 0.0
      %2562 = vmatpush1.msra.mxu0 0.0
      %2563 = vmatprep.subr.mxu0 0.0
      %2564 = vmatpush1.msra.mxu0 0.0
      %2565 = vmatprep.subr.mxu0 0.0
      %2566 = vmatpush1.msra.mxu0 0.0
      %2567 = vmatprep.subr.mxu0 0.0
      %2568 = vmatpush1.msra.mxu0 0.0
      %2569 = vmatprep.subr.mxu0 0.0
      %2570 = vmatpush1.msra.mxu0 0.0
      %2571 = vmatprep.subr.mxu0 0.0
      %2572 = vmatpush1.msra.mxu0 0.0
      %2573 = vmatprep.subr.mxu0 0.0
      %2574 = vmatpush1.msra.mxu0 0.0
      %2575 = vmatprep.subr.mxu0 0.0
      %2576 = vmatpush1.msra.mxu0 0.0
      %2577 = vmatprep.subr.mxu0 0.0
      %2578 = vmatpush1.msra.mxu0 0.0
      %2579 = vmatprep.subr.mxu0 0.0
      %2580 = vmatpush1.msra.mxu0 0.0
      %2581 = vmatprep.subr.mxu0 0.0
      %2582 = vmatpush1.msra.mxu0 0.0
      %2583 = vmatprep.subr.mxu0 0.0
      %2584 = vmatpush1.msra.mxu0 0.0
      %2585 = vmatprep.subr.mxu0 0.0
      %2586 = vmatpush1.msra.mxu0 0.0
      %2587 = vmatprep.subr.mxu0 0.0
      %2588 = vmatpush1.msra.mxu0 0.0
      %2589 = vmatprep.mubr.f32.mxu0 0.0
      %v2590 = vand.u32 %v2132, 4294901760
      %2591 = vmatmul.mubr.f32.gmra.mrb[0].mxu0 %v2590
      %v2592 = vpop.f32.mrb[0].mxu0
      %v2593 = vadd.f32 %v2497, %v2592
      %v2594 = vpop.f32.mrb[0].mxu0
      %v2595 = vadd.f32 %v2499, %v2594
      %2596 = vdwg.mxu0
      %v2597 = vand.u32 %v2122, 4294901760
      %2598 = vmatprep.subr.mxu0 %v2597
      %v2599 = vand.u32 %v2121, 4294901760
      %2600 = vmatpush1.msra.mxu0 %v2599
      %v2601 = vand.u32 %v2124, 4294901760
      %2602 = vmatprep.subr.mxu0 %v2601
      %v2603 = vand.u32 %v2123, 4294901760
      %2604 = vmatpush1.msra.mxu0 %v2603
      %v2605 = vand.u32 %v2126, 4294901760
      %2606 = vmatprep.subr.mxu0 %v2605
      %v2607 = vand.u32 %v2125, 4294901760
      %2608 = vmatpush1.msra.mxu0 %v2607
      %v2609 = vand.u32 %v2128, 4294901760
      %2610 = vmatprep.subr.mxu0 %v2609
      %v2611 = vand.u32 %v2127, 4294901760
      %2612 = vmatpush1.msra.mxu0 %v2611
      %2613 = vmatprep.subr.mxu0 0.0
      %2614 = vmatpush1.msra.mxu0 0.0
      %2615 = vmatprep.subr.mxu0 0.0
      %2616 = vmatpush1.msra.mxu0 0.0
      %2617 = vmatprep.subr.mxu0 0.0
      %2618 = vmatpush1.msra.mxu0 0.0
      %2619 = vmatprep.subr.mxu0 0.0
      %2620 = vmatpush1.msra.mxu0 0.0
      %2621 = vmatprep.subr.mxu0 0.0
      %2622 = vmatpush1.msra.mxu0 0.0
      %2623 = vmatprep.subr.mxu0 0.0
      %2624 = vmatpush1.msra.mxu0 0.0
      %2625 = vmatprep.subr.mxu0 0.0
      %2626 = vmatpush1.msra.mxu0 0.0
      %2627 = vmatprep.subr.mxu0 0.0
      %2628 = vmatpush1.msra.mxu0 0.0
      %2629 = vmatprep.subr.mxu0 0.0
      %2630 = vmatpush1.msra.mxu0 0.0
      %2631 = vmatprep.subr.mxu0 0.0
      %2632 = vmatpush1.msra.mxu0 0.0
      %2633 = vmatprep.subr.mxu0 0.0
      %2634 = vmatpush1.msra.mxu0 0.0
      %2635 = vmatprep.subr.mxu0 0.0
      %2636 = vmatpush1.msra.mxu0 0.0
      %2637 = vmatprep.subr.mxu0 0.0
      %2638 = vmatpush1.msra.mxu0 0.0
      %2639 = vmatprep.subr.mxu0 0.0
      %2640 = vmatpush1.msra.mxu0 0.0
      %2641 = vmatprep.subr.mxu0 0.0
      %2642 = vmatpush1.msra.mxu0 0.0
      %2643 = vmatprep.subr.mxu0 0.0
      %2644 = vmatpush1.msra.mxu0 0.0
      %2645 = vmatprep.subr.mxu0 0.0
      %2646 = vmatpush1.msra.mxu0 0.0
      %2647 = vmatprep.subr.mxu0 0.0
      %2648 = vmatpush1.msra.mxu0 0.0
      %2649 = vmatprep.subr.mxu0 0.0
      %2650 = vmatpush1.msra.mxu0 0.0
      %2651 = vmatprep.subr.mxu0 0.0
      %2652 = vmatpush1.msra.mxu0 0.0
      %2653 = vmatprep.subr.mxu0 0.0
      %2654 = vmatpush1.msra.mxu0 0.0
      %2655 = vmatprep.subr.mxu0 0.0
      %2656 = vmatpush1.msra.mxu0 0.0
      %2657 = vmatprep.subr.mxu0 0.0
      %2658 = vmatpush1.msra.mxu0 0.0
      %2659 = vmatprep.subr.mxu0 0.0
      %2660 = vmatpush1.msra.mxu0 0.0
      %2661 = vmatprep.subr.mxu0 0.0
      %2662 = vmatpush1.msra.mxu0 0.0
      %2663 = vmatprep.subr.mxu0 0.0
      %2664 = vmatpush1.msra.mxu0 0.0
      %2665 = vmatprep.subr.mxu0 0.0
      %2666 = vmatpush1.msra.mxu0 0.0
      %2667 = vmatprep.subr.mxu0 0.0
      %2668 = vmatpush1.msra.mxu0 0.0
      %2669 = vmatprep.mubr.f32.mxu0 0.0
      %v2670 = vand.u32 %v2132, 4294901760
      %2671 = vmatmul.mubr.f32.gmra.mrb[0].mxu0 %v2670
      %v2672 = vpop.f32.mrb[0].mxu0
      %v2673 = vadd.f32 %v2593, %v2672
      %v2674 = vpop.f32.mrb[0].mxu0
      %v2675 = vadd.f32 %v2595, %v2674
      %2676 = vdwg.mxu0
      %v2677 = vld [vmem:[%s12] sm:$0xff]
      %2679 = vset.pattern.permute.xlu0 0
      %2680 = vperm.xlu0 %2679, %v2677
      %v2681 = vpop.permute.xlu0 %2680
      %v2683 = vmul.f32 %v2673, %v2681
      %v2684 = vmul.f32 %v2675, %v2681
      %2685 = vset.pattern.permute.xlu0 1
      %2686 = vperm.xlu0 %2685, %v2677
      %v2687 = vpop.permute.xlu0 %2686
      %v2689 = vadd.f32 %v2683, %v2687
      %v2690 = vadd.f32 %v2684, %v2687
      %v2691 = vadd.f32 %v2689, %v441
      %v2692 = vadd.f32 %v2690, %v442
      %2693 = vst [vmem:[%s440] sm:$0xff] %v2691
      %2694 = vst [vmem:[%s440 + $0x8] sm:$0xff] %v2692
      %p2695 = scmp.lt.s32.totalorder %s24, 1
      %s2696 = scalar_select %p2695, %s24, 1
      %s2697 = smul.addr %s2696, 2
      %s2698 = smul.addr %s2697, 8
      %s2699 = scalar_lea.vmem %s13, %s2698
      // Predicated region
      $region73: #{mbconv_forward.1} parent=71 // pred_check
        %p2700 = pneg %p320
      $region74: #{mbconv_forward.1} parent=71 // pred_check_branch
        %2702 = sbr.rel (%p2700) target = $region76
      $region75: #{mbconv_forward.1} parent=71 // pred_region
        _
      $region76: #{mbconv_forward.1} parent=71 // pred_fallthru
        _
    $region72: #{mbconv_forward.1} parent=5 // pred_fallthru
      _
    %p2703 = scmp.le.s32.totalorder 2, %s19
    // Predicated region
    $region77: #{mbconv_forward.1} parent=5 // pred_check
      %p2704 = pneg %p2703
    $region78: #{mbconv_forward.1} parent=5 // pred_check_branch
      %2706 = sbr.rel (%p2704) target = $region80
    $region79: #{mbconv_forward.1} parent=5 // pred_region
      %s2707 = ssub.s32 %s19, 2
      // Predicated region
      $region81: #{mbconv_forward.1} parent=79 // pred_check
        %p2708 = pneg %p326
      $region82: #{mbconv_forward.1} parent=79 // pred_check_branch
        %2710 = sbr.rel (%p2708) target = $region84
      $region83: #{mbconv_forward.1} parent=79 // pred_region
        %p2711 = scmp.lt.s32.totalorder %s25, 1
        %s2712 = scalar_select %p2711, %s25, 1
        %s2713 = smul.addr %s2712, 2
        %s2714 = smul.addr %s2713, 8
        %s2715 = scalar_lea.vmem %s13, %s2714
      $region84: #{mbconv_forward.1} parent=79 // pred_fallthru
        _
    $region80: #{mbconv_forward.1} parent=5 // pred_fallthru
      _
  $region6: #{mbconv_forward.1} parent=0 // loop_footer
    %s23 = sadd.s32 1, %s19
  $region7: #{mbconv_forward.1} parent=0 // loop_footer_branch
    %18 = sbr.rel target = $region3
  $region8: #{mbconv_forward.1} parent=0 // loop_exit
    _

</llo_original>
